<compile_context>
chip_gen: v7x
topology: tpu7x:2x2x1
jax: 0.10.0
libtpu: 0.0.40
codegen_flags: <defaults>
</compile_context>

<pallas_src>
import functools
import math

import jax
import jax.numpy as jnp
from jax.experimental import pallas as pl
from jax.experimental.pallas import tpu as pltpu


def _layernorm_f32(x, w, b, eps=1e-5):
    # x: (T, E) f32, w/b: (1, E) f32.  var = E[x^2] - mean^2 (single pass).
    mu = jnp.mean(x, axis=-1, keepdims=True)
    ms = jnp.mean(x * x, axis=-1, keepdims=True)
    var = ms - mu * mu
    return (x - mu) * jax.lax.rsqrt(var + eps) * w + b


def _resampler_kernel(num_heads, head_dim, block_b, seq_len,
                      x_ref, qhb_ref, wkv_ref, lnkv_w_ref, lnkv_b_ref,
                      wk_ref, wv_ref, bk_ref, bv_ref, wo_ref, bo_ref,
                      out_ref):
    H, Dh, B, L = num_heads, head_dim, block_b, seq_len
    Q = qhb_ref.shape[1]
    E = wk_ref.shape[1]
    bf16 = jnp.bfloat16
    f32 = jnp.float32

    # ---- K/V path: one (B*L, .) matmul per projection (bf16 in, f32 acc) ----
    x = x_ref[...].astype(bf16).reshape(B * L, x_ref.shape[-1])          # cast in VMEM
    kv = jnp.dot(x, wkv_ref[...], preferred_element_type=f32)            # (B*L, E) f32
    kv_b = _layernorm_f32(kv, lnkv_w_ref[...], lnkv_b_ref[...]).astype(bf16)

    # Biases added once at full (B*L, E); cast to bf16 immediately so the head
    # relayout and everything downstream is half width.
    kp = (jnp.dot(kv_b, wk_ref[...], preferred_element_type=f32)
          + bk_ref[...]).astype(bf16)                                    # (B*L, E)
    vp = (jnp.dot(kv_b, wv_ref[...], preferred_element_type=f32)
          + bv_ref[...]).astype(bf16)                                    # (B*L, E)

    # ---- head relayout ONCE per block: H static lane slices + one stack ----
    # khb/vhb[b*H + h, l, d] == {K,V}[b, l, h*Dh + d]
    kp3 = kp.reshape(B, L, E)
    vp3 = vp.reshape(B, L, E)
    khb = jnp.stack([kp3[:, :, h * Dh:(h + 1) * Dh] for h in range(H)],
                    axis=1).reshape(B * H, L, Dh)
    vhb = jnp.stack([vp3[:, :, h * Dh:(h + 1) * Dh] for h in range(H)],
                    axis=1).reshape(B * H, L, Dh)

    # ---- attention, batched over flattened (B*H); no per-batch python loop ----
    qhb = qhb_ref[...]                                   # (B*H, Q, Dh) pre-scaled bf16
    s = jax.lax.dot_general(qhb, khb, (((2,), (2,)), ((0,), (0,))),
                            preferred_element_type=f32)                 # (G, Q, L)
    m = jnp.max(s, axis=-1, keepdims=True)
    p = jnp.exp(s - m)
    denom = jnp.sum(p, axis=-1, keepdims=True)
    p = (p * pl.reciprocal(denom, approx=True)).astype(bf16)
    o = jax.lax.dot_general(p, vhb, (((2,), (1,)), ((0,), (0,))),
                            preferred_element_type=f32).astype(bf16)    # (G, Q, Dh)

    # ---- merge heads (lane concat) + output projection at full depth K=E ----
    o4 = o.reshape(B, H, Q, Dh)
    o_cat = jnp.concatenate([o4[:, h] for h in range(H)], axis=-1)      # (B, Q, E)
    z = jnp.dot(o_cat.reshape(B * Q, E), wo_ref[...],
                preferred_element_type=f32) + bo_ref[...]               # (B*Q, E) f32
    out_ref[...] = z.reshape(B, Q, E).astype(out_ref.dtype)


def _pick_block_b(N, L, target_rows=512):
    # Largest divisor of N such that (a) block_b*L <= ~target_rows (MXU M fill
    # vs VMEM) and (b) the grid has >= 2 steps so both v7x TensorCores get work.
    cap = max(1, target_rows // max(L, 1))
    if N >= 2:
        cap = min(cap, N // 2)
    cap = max(1, min(cap, N))
    for b in range(cap, 0, -1):
        if N % b == 0:
            return b
    return 1


def _vmem_limit_bytes():
    # ~75% of physical VMEM: 96 MiB on v5e/v6e (128 MiB), 48 MiB on v7x (64 MiB).
    try:
        cap = pltpu.get_tpu_info().vmem_capacity_bytes
    except Exception:
        cap = 64 * 1024 * 1024
    return int(min(cap * 3 // 4, 100 * 1024 * 1024))


def _const_spec(shape, index_map):
    # Constant-index inputs (weights / LN params / biases / queries) don't need
    # double buffers; single-buffer them to halve their VMEM footprint.
    try:
        return pl.BlockSpec(shape, index_map, pipeline_mode=pl.Buffered(1))
    except TypeError:  # older jax without pipeline_mode kwarg
        return pl.BlockSpec(shape, index_map)


def resampler_forward(x, params, num_heads, block_b=None):
    """x: (N, L, kv_dim) -> (N, num_queries, embed_dim)."""
    N, L, KV = x.shape
    Q, E = params["query"].shape
    H = num_heads
    Dh = E // H
    bf16 = jnp.bfloat16

    if block_b is None:
        block_b = _pick_block_b(N, L)
    assert N % block_b == 0, "block_b must divide N"
    # TODO(synk): pad/mask a ragged final batch block instead of asserting.

    # ---- batch-invariant query path, computed ONCE outside the kernel ----
    q = _layernorm_f32(params["query"], params["lnq_w"], params["lnq_b"])   # (Q, E)
    qp = (q @ params["wq"] + params["bq"]) * (1.0 / math.sqrt(Dh))          # (Q, E)
    qh = jnp.transpose(qp.reshape(Q, H, Dh), (1, 0, 2))                     # (H, Q, Dh)
    # Broadcast across the batch block and flatten to the kernel's (B*H) batch
    # order: qhb[b*H + h] == qh[h].
    qhb = jnp.broadcast_to(qh[None], (block_b, H, Q, Dh)) \
             .reshape(block_b * H, Q, Dh).astype(bf16)

    # bf16 matmul weights; biases / LN params stay f32.  x stays f32 here.
    wkv_bf = params["wkv"].astype(bf16)
    wk_bf = params["wk"].astype(bf16)
    wv_bf = params["wv"].astype(bf16)
    wo_bf = params["wo"].astype(bf16)

    kernel = functools.partial(_resampler_kernel, H, Dh, block_b, L)

    def c2(shape):
        return _const_spec(shape, lambda b: (0, 0))

    def c3(shape):
        return _const_spec(shape, lambda b: (0, 0, 0))

    # NOTE(v7x): for production-sized E (thousands), tile Wk/Wv/Wo along their
    # output-feature dim with extra grid axes (or stream them from pl.ANY/HBM)
    # — full ExE bf16 blocks exceed v7x's 64 MiB VMEM even single-buffered.
    # Output could be emitted in bf16 if downstream allows (halves writeback).
    return pl.pallas_call(
        kernel,
        out_shape=jax.ShapeDtypeStruct((N, Q, E), jnp.float32),
        grid_spec=pltpu.PrefetchScalarGridSpec(
            num_scalar_prefetch=0,
            grid=(N // block_b,),
            in_specs=[
                pl.BlockSpec((block_b, L, KV), lambda b: (b, 0, 0)),  # x (f32)
                c3((block_b * H, Q, Dh)),                             # qhb (bf16)
                c2((KV, E)),                                          # kv_proj weight (pre-T)
                c2((1, E)), c2((1, E)),                               # ln_kv w, b (f32)
                c2((E, E)), c2((E, E)),                               # Wk^T, Wv^T (bf16)
                c2((1, E)), c2((1, E)),                               # bk, bv (f32)
                c2((E, E)),                                           # Wo^T (bf16)
                c2((1, E)),                                           # bo (f32)
            ],
            out_specs=pl.BlockSpec((block_b, Q, E), lambda b: (b, 0, 0)),
        ),
        compiler_params=pltpu.CompilerParams(
            dimension_semantics=("parallel",),
            vmem_limit_bytes=_vmem_limit_bytes(),
        ),
    )(x, qhb, wkv_bf,
      params["lnkv_w"], params["lnkv_b"],
      wk_bf, wv_bf, params["bk"], params["bv"],
      wo_bf, params["bo"])


def resampler_reference(x, params, num_heads):
    """Pure-JAX f32 reference (mirrors the PyTorch forward)."""
    Q, E = params["query"].shape
    head_dim = E // num_heads

    def ln(v, w, b, eps=1e-5):
        mu = jnp.mean(v, axis=-1, keepdims=True)
        var = jnp.mean((v - mu) ** 2, axis=-1, keepdims=True)
        return (v - mu) * jax.lax.rsqrt(var + eps) * w + b

    kv = jnp.einsum("nlk,ke->nle", x, params["wkv"])
    kv = ln(kv, params["lnkv_w"], params["lnkv_b"])
    q = ln(params["query"], params["lnq_w"], params["lnq_b"])          # (Q, E)

    qp = q @ params["wq"] + params["bq"]                               # (Q, E)
    kp = jnp.einsum("nle,ef->nlf", kv, params["wk"]) + params["bk"]    # (N, L, E)
    vp = jnp.einsum("nle,ef->nlf", kv, params["wv"]) + params["bv"]

    N, L, _ = x.shape
    qh = qp.reshape(Q, num_heads, head_dim)
    kh = kp.reshape(N, L, num_heads, head_dim)
    vh = vp.reshape(N, L, num_heads, head_dim)
    s = jnp.einsum("qhd,nlhd->nhql", qh, kh) / math.sqrt(head_dim)
    p = jax.nn.softmax(s, axis=-1)
    o = jnp.einsum("nhql,nlhd->nqhd", p, vh).reshape(N, Q, E)
    return o @ params["wo"] + params["bo"]


def make_params(key, grid_size, embed_dim, kv_dim):
    Q = grid_size ** 2
    E = embed_dim
    ks = jax.random.split(key, 8)
    std = 0.02
    return {
        "query": jax.random.normal(ks[0], (Q, E), jnp.float32) * std,
        # kv_proj weight stored pre-transposed: (kv_dim, E) so x @ wkv
        "wkv": jax.random.normal(ks[1], (kv_dim, E), jnp.float32) * std,
        "lnkv_w": jnp.ones((1, E), jnp.float32),
        "lnkv_b": jnp.zeros((1, E), jnp.float32),
        "lnq_w": jnp.ones((1, E), jnp.float32),
        "lnq_b": jnp.zeros((1, E), jnp.float32),
        # attention in_proj split into q/k/v, pre-transposed to (E, E)
        "wq": jax.random.normal(ks[2], (E, E), jnp.float32) * std,
        "wk": jax.random.normal(ks[3], (E, E), jnp.float32) * std,
        "wv": jax.random.normal(ks[4], (E, E), jnp.float32) * std,
        "bq": jnp.zeros((1, E), jnp.float32),
        "bk": jnp.zeros((1, E), jnp.float32),
        "bv": jnp.zeros((1, E), jnp.float32),
        # out_proj pre-transposed
        "wo": jax.random.normal(ks[5], (E, E), jnp.float32) * std,
        "bo": jnp.zeros((1, E), jnp.float32),
    }


if __name__ == "__main__":
    # Small shapes consistent with the module:
    #   grid_size=4 -> num_queries=16, embed_dim=128, num_heads=4, kv_dim=64
    #   x: (batch=2, seq=32, kv_dim=64)
    grid_size, embed_dim, num_heads, kv_dim = 4, 128, 4, 64
    N, L = 2, 32

    key = jax.random.PRNGKey(0)
    kx, kp = jax.random.split(key)
    x = jax.random.normal(kx, (N, L, kv_dim), jnp.float32)
    params = make_params(kp, grid_size, embed_dim, kv_dim)

    out = resampler_forward(x, params, num_heads)
    out = jax.block_until_ready(out)

    ref = resampler_reference(x, params, num_heads)
    assert out.shape == (N, grid_size ** 2, embed_dim)
    # bf16 matmul inputs with f32 accumulation -> slightly looser tolerance.
    assert jnp.allclose(out, ref, atol=3e-3, rtol=3e-2), "mismatch vs reference"

    print("KERNEL_OK")
</pallas_src>

<mosaic_0001>
module attributes {stable_mosaic.version = 11 : i64} {
  func.func @_resampler_kernel(%arg0: i32, %arg1: memref<1x32x64xf32, #tpu.memory_space<vmem>>, %arg2: memref<4x16x32xbf16, #tpu.memory_space<vmem>>, %arg3: memref<64x128xbf16, #tpu.memory_space<vmem>>, %arg4: memref<1x128xf32, #tpu.memory_space<vmem>>, %arg5: memref<1x128xf32, #tpu.memory_space<vmem>>, %arg6: memref<128x128xbf16, #tpu.memory_space<vmem>>, %arg7: memref<128x128xbf16, #tpu.memory_space<vmem>>, %arg8: memref<1x128xf32, #tpu.memory_space<vmem>>, %arg9: memref<1x128xf32, #tpu.memory_space<vmem>>, %arg10: memref<128x128xbf16, #tpu.memory_space<vmem>>, %arg11: memref<1x128xf32, #tpu.memory_space<vmem>>, %arg12: memref<1x16x128xf32, #tpu.memory_space<vmem>>) attributes {dimension_semantics = [#tpu.dimension_semantics<parallel>], iteration_bounds = array<i64: 2>, scalar_prefetch = 0 : i64, scratch_operands = 0 : i64, tpu.core_type = #tpu.core_type<tc>, window_params = [{transform_indices = @transform_0, window_bounds = array<i64: 1, 32, 64>}, {pipeline_mode = #tpu.pipeline_mode<synchronous>, transform_indices = @transform_1, window_bounds = array<i64: 4, 16, 32>}, {pipeline_mode = #tpu.pipeline_mode<synchronous>, transform_indices = @transform_2, window_bounds = array<i64: 64, 128>}, {pipeline_mode = #tpu.pipeline_mode<synchronous>, transform_indices = @transform_3, window_bounds = array<i64: 1, 128>}, {pipeline_mode = #tpu.pipeline_mode<synchronous>, transform_indices = @transform_4, window_bounds = array<i64: 1, 128>}, {pipeline_mode = #tpu.pipeline_mode<synchronous>, transform_indices = @transform_5, window_bounds = array<i64: 128, 128>}, {pipeline_mode = #tpu.pipeline_mode<synchronous>, transform_indices = @transform_6, window_bounds = array<i64: 128, 128>}, {pipeline_mode = #tpu.pipeline_mode<synchronous>, transform_indices = @transform_7, window_bounds = array<i64: 1, 128>}, {pipeline_mode = #tpu.pipeline_mode<synchronous>, transform_indices = @transform_8, window_bounds = array<i64: 1, 128>}, {pipeline_mode = #tpu.pipeline_mode<synchronous>, transform_indices = @transform_9, window_bounds = array<i64: 128, 128>}, {pipeline_mode = #tpu.pipeline_mode<synchronous>, transform_indices = @transform_10, window_bounds = array<i64: 1, 128>}, {transform_indices = @transform_11, window_bounds = array<i64: 1, 16, 128>}]} {
    %c0 = arith.constant 0 : index
    %c0_0 = arith.constant 0 : index
    %c0_1 = arith.constant 0 : index
    %0 = vector.load %arg1[%c0, %c0_0, %c0_1] : memref<1x32x64xf32, #tpu.memory_space<vmem>>, vector<1x32x64xf32>
    %1 = arith.truncf %0 : vector<1x32x64xf32> to vector<1x32x64xbf16>
    %2 = vector.shape_cast %1 : vector<1x32x64xbf16> to vector<32x64xbf16>
    %c0_2 = arith.constant 0 : index
    %c0_3 = arith.constant 0 : index
    %3 = vector.load %arg3[%c0_2, %c0_3] : memref<64x128xbf16, #tpu.memory_space<vmem>>, vector<64x128xbf16>
    %cst = arith.constant dense<0.000000e+00> : vector<32x128xf32>
    %4 = tpu.matmul %2, %3, %cst {dimension_numbers = #tpu.dot_dimension_numbers<[1], [0], [0], [1], [0, 0, 1, 1], [], []>} : vector<32x64xbf16>, vector<64x128xbf16>, vector<32x128xf32> -> vector<32x128xf32>
    %c0_4 = arith.constant 0 : index
    %c0_5 = arith.constant 0 : index
    %5 = vector.load %arg4[%c0_4, %c0_5] : memref<1x128xf32, #tpu.memory_space<vmem>>, vector<1x128xf32>
    %c0_6 = arith.constant 0 : index
    %c0_7 = arith.constant 0 : index
    %6 = vector.load %arg5[%c0_6, %c0_7] : memref<1x128xf32, #tpu.memory_space<vmem>>, vector<1x128xf32>
    %cst_8 = arith.constant dense<0.000000e+00> : vector<32xf32>
    %7 = vector.multi_reduction <add>, %4, %cst_8 [1] : vector<32x128xf32> to vector<32xf32>
    %8 = vector.shape_cast %7 : vector<32xf32> to vector<32x1xf32>
    %cst_9 = arith.constant 1.280000e+02 : f32
    %9 = vector.broadcast %cst_9 : f32 to vector<32x1xf32>
    %10 = arith.divf %8, %9 : vector<32x1xf32>
    %11 = arith.mulf %4, %4 : vector<32x128xf32>
    %cst_10 = arith.constant dense<0.000000e+00> : vector<32xf32>
    %12 = vector.multi_reduction <add>, %11, %cst_10 [1] : vector<32x128xf32> to vector<32xf32>
    %13 = vector.shape_cast %12 : vector<32xf32> to vector<32x1xf32>
    %cst_11 = arith.constant 1.280000e+02 : f32
    %14 = vector.broadcast %cst_11 : f32 to vector<32x1xf32>
    %15 = arith.divf %13, %14 : vector<32x1xf32>
    %16 = arith.mulf %10, %10 : vector<32x1xf32>
    %17 = arith.subf %15, %16 : vector<32x1xf32>
    %18 = vector.broadcast %10 : vector<32x1xf32> to vector<32x128xf32>
    %19 = arith.subf %4, %18 : vector<32x128xf32>
    %cst_12 = arith.constant 9.99999974E-6 : f32
    %20 = vector.broadcast %cst_12 : f32 to vector<32x1xf32>
    %21 = arith.addf %17, %20 : vector<32x1xf32>
    %22 = math.rsqrt %21 : vector<32x1xf32>
    %23 = vector.broadcast %22 : vector<32x1xf32> to vector<32x128xf32>
    %24 = arith.mulf %19, %23 : vector<32x128xf32>
    %25 = vector.broadcast %5 : vector<1x128xf32> to vector<32x128xf32>
    %26 = arith.mulf %24, %25 : vector<32x128xf32>
    %27 = vector.broadcast %6 : vector<1x128xf32> to vector<32x128xf32>
    %28 = arith.addf %26, %27 : vector<32x128xf32>
    %29 = arith.truncf %28 : vector<32x128xf32> to vector<32x128xbf16>
    %c0_13 = arith.constant 0 : index
    %c0_14 = arith.constant 0 : index
    %30 = vector.load %arg6[%c0_13, %c0_14] : memref<128x128xbf16, #tpu.memory_space<vmem>>, vector<128x128xbf16>
    %cst_15 = arith.constant dense<0.000000e+00> : vector<32x128xf32>
    %31 = tpu.matmul %29, %30, %cst_15 {dimension_numbers = #tpu.dot_dimension_numbers<[1], [0], [0], [1], [0, 0, 1, 1], [], []>} : vector<32x128xbf16>, vector<128x128xbf16>, vector<32x128xf32> -> vector<32x128xf32>
    %c0_16 = arith.constant 0 : index
    %c0_17 = arith.constant 0 : index
    %32 = vector.load %arg8[%c0_16, %c0_17] : memref<1x128xf32, #tpu.memory_space<vmem>>, vector<1x128xf32>
    %33 = vector.broadcast %32 : vector<1x128xf32> to vector<32x128xf32>
    %34 = arith.addf %31, %33 : vector<32x128xf32>
    %35 = arith.truncf %34 : vector<32x128xf32> to vector<32x128xbf16>
    %c0_18 = arith.constant 0 : index
    %c0_19 = arith.constant 0 : index
    %36 = vector.load %arg7[%c0_18, %c0_19] : memref<128x128xbf16, #tpu.memory_space<vmem>>, vector<128x128xbf16>
    %cst_20 = arith.constant dense<0.000000e+00> : vector<32x128xf32>
    %37 = tpu.matmul %29, %36, %cst_20 {dimension_numbers = #tpu.dot_dimension_numbers<[1], [0], [0], [1], [0, 0, 1, 1], [], []>} : vector<32x128xbf16>, vector<128x128xbf16>, vector<32x128xf32> -> vector<32x128xf32>
    %c0_21 = arith.constant 0 : index
    %c0_22 = arith.constant 0 : index
    %38 = vector.load %arg9[%c0_21, %c0_22] : memref<1x128xf32, #tpu.memory_space<vmem>>, vector<1x128xf32>
    %39 = vector.broadcast %38 : vector<1x128xf32> to vector<32x128xf32>
    %40 = arith.addf %37, %39 : vector<32x128xf32>
    %41 = arith.truncf %40 : vector<32x128xf32> to vector<32x128xbf16>
    %42 = vector.shape_cast %35 : vector<32x128xbf16> to vector<1x32x128xbf16>
    %43 = vector.shape_cast %41 : vector<32x128xbf16> to vector<1x32x128xbf16>
    %44 = vector.extract_strided_slice %42 {offsets = [0, 0, 0], sizes = [1, 32, 32], strides = [1, 1, 1]} : vector<1x32x128xbf16> to vector<1x32x32xbf16>
    %45 = vector.extract_strided_slice %42 {offsets = [0, 0, 32], sizes = [1, 32, 32], strides = [1, 1, 1]} : vector<1x32x128xbf16> to vector<1x32x32xbf16>
    %46 = vector.extract_strided_slice %42 {offsets = [0, 0, 64], sizes = [1, 32, 32], strides = [1, 1, 1]} : vector<1x32x128xbf16> to vector<1x32x32xbf16>
    %47 = vector.extract_strided_slice %42 {offsets = [0, 0, 96], sizes = [1, 32, 32], strides = [1, 1, 1]} : vector<1x32x128xbf16> to vector<1x32x32xbf16>
    %48 = vector.shape_cast %44 : vector<1x32x32xbf16> to vector<1x1x32x32xbf16>
    %49 = vector.shape_cast %45 : vector<1x32x32xbf16> to vector<1x1x32x32xbf16>
    %50 = vector.shape_cast %46 : vector<1x32x32xbf16> to vector<1x1x32x32xbf16>
    %51 = vector.shape_cast %47 : vector<1x32x32xbf16> to vector<1x1x32x32xbf16>
    %52 = tpu.concatenate %48, %49, %50, %51 in 1 : vector<1x1x32x32xbf16>, vector<1x1x32x32xbf16>, vector<1x1x32x32xbf16>, vector<1x1x32x32xbf16> -> vector<1x4x32x32xbf16>
    %53 = vector.shape_cast %52 : vector<1x4x32x32xbf16> to vector<4x32x32xbf16>
    %54 = vector.extract_strided_slice %43 {offsets = [0, 0, 0], sizes = [1, 32, 32], strides = [1, 1, 1]} : vector<1x32x128xbf16> to vector<1x32x32xbf16>
    %55 = vector.extract_strided_slice %43 {offsets = [0, 0, 32], sizes = [1, 32, 32], strides = [1, 1, 1]} : vector<1x32x128xbf16> to vector<1x32x32xbf16>
    %56 = vector.extract_strided_slice %43 {offsets = [0, 0, 64], sizes = [1, 32, 32], strides = [1, 1, 1]} : vector<1x32x128xbf16> to vector<1x32x32xbf16>
    %57 = vector.extract_strided_slice %43 {offsets = [0, 0, 96], sizes = [1, 32, 32], strides = [1, 1, 1]} : vector<1x32x128xbf16> to vector<1x32x32xbf16>
    %58 = vector.shape_cast %54 : vector<1x32x32xbf16> to vector<1x1x32x32xbf16>
    %59 = vector.shape_cast %55 : vector<1x32x32xbf16> to vector<1x1x32x32xbf16>
    %60 = vector.shape_cast %56 : vector<1x32x32xbf16> to vector<1x1x32x32xbf16>
    %61 = vector.shape_cast %57 : vector<1x32x32xbf16> to vector<1x1x32x32xbf16>
    %62 = tpu.concatenate %58, %59, %60, %61 in 1 : vector<1x1x32x32xbf16>, vector<1x1x32x32xbf16>, vector<1x1x32x32xbf16>, vector<1x1x32x32xbf16> -> vector<1x4x32x32xbf16>
    %63 = vector.shape_cast %62 : vector<1x4x32x32xbf16> to vector<4x32x32xbf16>
    %c0_23 = arith.constant 0 : index
    %c0_24 = arith.constant 0 : index
    %c0_25 = arith.constant 0 : index
    %64 = vector.load %arg2[%c0_23, %c0_24, %c0_25] : memref<4x16x32xbf16, #tpu.memory_space<vmem>>, vector<4x16x32xbf16>
    %cst_26 = arith.constant dense<0.000000e+00> : vector<4x16x32xf32>
    %65 = tpu.matmul %64, %53, %cst_26 {dimension_numbers = #tpu.dot_dimension_numbers<[2], [2], [1], [1], [0, 0, 0, 1, 1, 1], [0], [0]>} : vector<4x16x32xbf16>, vector<4x32x32xbf16>, vector<4x16x32xf32> -> vector<4x16x32xf32>
    %cst_27 = arith.constant dense<0xFF800000> : vector<4x16xf32>
    %66 = vector.multi_reduction <maximumf>, %65, %cst_27 [2] : vector<4x16x32xf32> to vector<4x16xf32>
    %67 = vector.shape_cast %66 : vector<4x16xf32> to vector<4x16x1xf32>
    %68 = vector.broadcast %67 : vector<4x16x1xf32> to vector<4x16x32xf32>
    %69 = arith.subf %65, %68 : vector<4x16x32xf32>
    %70 = math.exp %69 : vector<4x16x32xf32>
    %cst_28 = arith.constant dense<0.000000e+00> : vector<4x16xf32>
    %71 = vector.multi_reduction <add>, %70, %cst_28 [2] : vector<4x16x32xf32> to vector<4x16xf32>
    %72 = vector.shape_cast %71 : vector<4x16xf32> to vector<4x16x1xf32>
    %73 = tpu.reciprocal %72 {approx = true} : vector<4x16x1xf32> -> vector<4x16x1xf32>
    %74 = vector.broadcast %73 : vector<4x16x1xf32> to vector<4x16x32xf32>
    %75 = arith.mulf %70, %74 : vector<4x16x32xf32>
    %76 = arith.truncf %75 : vector<4x16x32xf32> to vector<4x16x32xbf16>
    %cst_29 = arith.constant dense<0.000000e+00> : vector<4x16x32xf32>
    %77 = tpu.matmul %76, %63, %cst_29 {dimension_numbers = #tpu.dot_dimension_numbers<[2], [1], [1], [2], [0, 0, 0, 1, 1, 2], [0], [0]>} : vector<4x16x32xbf16>, vector<4x32x32xbf16>, vector<4x16x32xf32> -> vector<4x16x32xf32>
    %78 = arith.truncf %77 : vector<4x16x32xf32> to vector<4x16x32xbf16>
    %79 = vector.shape_cast %78 : vector<4x16x32xbf16> to vector<1x4x16x32xbf16>
    %80 = vector.extract_strided_slice %79 {offsets = [0, 0, 0, 0], sizes = [1, 1, 16, 32], strides = [1, 1, 1, 1]} : vector<1x4x16x32xbf16> to vector<1x1x16x32xbf16>
    %81 = vector.shape_cast %80 : vector<1x1x16x32xbf16> to vector<1x16x32xbf16>
    %82 = vector.extract_strided_slice %79 {offsets = [0, 1, 0, 0], sizes = [1, 1, 16, 32], strides = [1, 1, 1, 1]} : vector<1x4x16x32xbf16> to vector<1x1x16x32xbf16>
    %83 = vector.shape_cast %82 : vector<1x1x16x32xbf16> to vector<1x16x32xbf16>
    %84 = vector.extract_strided_slice %79 {offsets = [0, 2, 0, 0], sizes = [1, 1, 16, 32], strides = [1, 1, 1, 1]} : vector<1x4x16x32xbf16> to vector<1x1x16x32xbf16>
    %85 = vector.shape_cast %84 : vector<1x1x16x32xbf16> to vector<1x16x32xbf16>
    %86 = vector.extract_strided_slice %79 {offsets = [0, 3, 0, 0], sizes = [1, 1, 16, 32], strides = [1, 1, 1, 1]} : vector<1x4x16x32xbf16> to vector<1x1x16x32xbf16>
    %87 = vector.shape_cast %86 : vector<1x1x16x32xbf16> to vector<1x16x32xbf16>
    %88 = tpu.concatenate %81, %83, %85, %87 in 2 : vector<1x16x32xbf16>, vector<1x16x32xbf16>, vector<1x16x32xbf16>, vector<1x16x32xbf16> -> vector<1x16x128xbf16>
    %89 = vector.shape_cast %88 : vector<1x16x128xbf16> to vector<16x128xbf16>
    %c0_30 = arith.constant 0 : index
    %c0_31 = arith.constant 0 : index
    %90 = vector.load %arg10[%c0_30, %c0_31] : memref<128x128xbf16, #tpu.memory_space<vmem>>, vector<128x128xbf16>
    %cst_32 = arith.constant dense<0.000000e+00> : vector<16x128xf32>
    %91 = tpu.matmul %89, %90, %cst_32 {dimension_numbers = #tpu.dot_dimension_numbers<[1], [0], [0], [1], [0, 0, 1, 1], [], []>} : vector<16x128xbf16>, vector<128x128xbf16>, vector<16x128xf32> -> vector<16x128xf32>
    %c0_33 = arith.constant 0 : index
    %c0_34 = arith.constant 0 : index
    %92 = vector.load %arg11[%c0_33, %c0_34] : memref<1x128xf32, #tpu.memory_space<vmem>>, vector<1x128xf32>
    %93 = vector.broadcast %92 : vector<1x128xf32> to vector<16x128xf32>
    %94 = arith.addf %91, %93 : vector<16x128xf32>
    %95 = vector.shape_cast %94 : vector<16x128xf32> to vector<1x16x128xf32>
    %c0_35 = arith.constant 0 : index
    %c0_36 = arith.constant 0 : index
    %c0_37 = arith.constant 0 : index
    %96 = vector.load %arg12[%c0_35, %c0_36, %c0_37] : memref<1x16x128xf32, #tpu.memory_space<vmem>>, vector<1x16x128xf32>
    tpu.vector_store %arg12[%c0_35, %c0_36, %c0_37], %95 {strides = array<i32>} : memref<1x16x128xf32, #tpu.memory_space<vmem>>, vector<1x16x128xf32>,
    return
  }
  func.func @transform_0(%arg0: i32) -> (i32, i32, i32) {
    %c0_i32 = arith.constant 0 : i32
    %c0_i32_0 = arith.constant 0 : i32
    %c0_i32_1 = arith.constant 0 : i32
    return %arg0, %c0_i32, %c0_i32_0 : i32, i32, i32
  }
  func.func @transform_1(%arg0: i32) -> (i32, i32, i32) {
    %c0_i32 = arith.constant 0 : i32
    %c0_i32_0 = arith.constant 0 : i32
    %c0_i32_1 = arith.constant 0 : i32
    %c0_i32_2 = arith.constant 0 : i32
    return %c0_i32, %c0_i32_0, %c0_i32_1 : i32, i32, i32
  }
  func.func @transform_2(%arg0: i32) -> (i32, i32) {
    %c0_i32 = arith.constant 0 : i32
    %c0_i32_0 = arith.constant 0 : i32
    %c0_i32_1 = arith.constant 0 : i32
    return %c0_i32, %c0_i32_0 : i32, i32
  }
  func.func @transform_3(%arg0: i32) -> (i32, i32) {
    %c0_i32 = arith.constant 0 : i32
    %c0_i32_0 = arith.constant 0 : i32
    %c0_i32_1 = arith.constant 0 : i32
    return %c0_i32, %c0_i32_0 : i32, i32
  }
  func.func @transform_4(%arg0: i32) -> (i32, i32) {
    %c0_i32 = arith.constant 0 : i32
    %c0_i32_0 = arith.constant 0 : i32
    %c0_i32_1 = arith.constant 0 : i32
    return %c0_i32, %c0_i32_0 : i32, i32
  }
  func.func @transform_5(%arg0: i32) -> (i32, i32) {
    %c0_i32 = arith.constant 0 : i32
    %c0_i32_0 = arith.constant 0 : i32
    %c0_i32_1 = arith.constant 0 : i32
    return %c0_i32, %c0_i32_0 : i32, i32
  }
  func.func @transform_6(%arg0: i32) -> (i32, i32) {
    %c0_i32 = arith.constant 0 : i32
    %c0_i32_0 = arith.constant 0 : i32
    %c0_i32_1 = arith.constant 0 : i32
    return %c0_i32, %c0_i32_0 : i32, i32
  }
  func.func @transform_7(%arg0: i32) -> (i32, i32) {
    %c0_i32 = arith.constant 0 : i32
    %c0_i32_0 = arith.constant 0 : i32
    %c0_i32_1 = arith.constant 0 : i32
    return %c0_i32, %c0_i32_0 : i32, i32
  }
  func.func @transform_8(%arg0: i32) -> (i32, i32) {
    %c0_i32 = arith.constant 0 : i32
    %c0_i32_0 = arith.constant 0 : i32
    %c0_i32_1 = arith.constant 0 : i32
    return %c0_i32, %c0_i32_0 : i32, i32
  }
  func.func @transform_9(%arg0: i32) -> (i32, i32) {
    %c0_i32 = arith.constant 0 : i32
    %c0_i32_0 = arith.constant 0 : i32
    %c0_i32_1 = arith.constant 0 : i32
    return %c0_i32, %c0_i32_0 : i32, i32
  }
  func.func @transform_10(%arg0: i32) -> (i32, i32) {
    %c0_i32 = arith.constant 0 : i32
    %c0_i32_0 = arith.constant 0 : i32
    %c0_i32_1 = arith.constant 0 : i32
    return %c0_i32, %c0_i32_0 : i32, i32
  }
  func.func @transform_11(%arg0: i32) -> (i32, i32, i32) {
    %c0_i32 = arith.constant 0 : i32
    %c0_i32_0 = arith.constant 0 : i32
    %c0_i32_1 = arith.constant 0 : i32
    return %arg0, %c0_i32, %c0_i32_0 : i32, i32, i32
  }
}

</mosaic_0001>

<llo_original>
// kernel: tpu_custom_call.1
$region0: #{tpu_custom_call.1}
  #allocation0 [shape = 'u32[]', space=smem, size = 0x4, offset = 0x4, fixed_abs, tag = 'smem constant byte address 0x4 - core index']
  #allocation1 [shape = 'u32[144,128]{1,0:T(1,128)}', space=vmem, size = 0x12000, scoped, tag = 'internal scratch']
  %s0 = inlined_call_operand.hbm [shape: f32[2,32,64], index: 0, kind: input, shape index: {}]
  %s1 = inlined_call_operand.hbm [shape: bf16[4,16,32], index: 1, kind: input, shape index: {}]
  %s2 = inlined_call_operand.hbm [shape: bf16[64,128], index: 2, kind: input, shape index: {}]
  %s3 = inlined_call_operand.vmem [shape: f32[1,128], index: 3, kind: input, shape index: {}]
  %s4 = inlined_call_operand.vmem [shape: f32[1,128], index: 4, kind: input, shape index: {}]
  %s5 = inlined_call_operand.hbm [shape: bf16[128,128], index: 5, kind: input, shape index: {}]
  %s6 = inlined_call_operand.hbm [shape: bf16[128,128], index: 6, kind: input, shape index: {}]
  %s7 = inlined_call_operand.vmem [shape: f32[1,128], index: 7, kind: input, shape index: {}]
  %s8 = inlined_call_operand.vmem [shape: f32[1,128], index: 8, kind: input, shape index: {}]
  %s9 = inlined_call_operand.hbm [shape: bf16[128,128], index: 9, kind: input, shape index: {}]
  %s10 = inlined_call_operand.vmem [shape: f32[1,128], index: 10, kind: input, shape index: {}]
  %s11 = inlined_call_operand.hbm [shape: f32[2,16,128], index: 11, kind: output, shape index: {}]
  %s12 = sld [smem:[#allocation0]]
  $region101: #{tpu_custom_call.1} parent=0
    _
  %s14 = ssub.s32 1, %s12
  %s15 = scalar_select 0, %s14, %s12
  $region1: #{tpu_custom_call.1} parent=0
    #allocation2 [shape = 'u8[32768]{0}', space=vmem, size = 0x8000, scoped, tag = 'input window, operand 0']
    #allocation3 [shape = 's32[2]{0}', space=sflag, size = 0x8, scoped, tag = 'scoped memory for tpu_custom_call.1']
    #allocation4 [shape = 's32[2]{0}', space=sflag, size = 0x8, scoped, tag = 'scoped memory for tpu_custom_call.1']
    #allocation5 [shape = 'u8[16384]{0}', space=vmem, size = 0x4000, scoped, tag = 'input window, operand 1, single buffered']
    #allocation6 [shape = 's32[1]{0}', space=sflag, size = 0x4, scoped, tag = 'scoped memory for tpu_custom_call.1']
    #allocation7 [shape = 'u8[16384]{0}', space=vmem, size = 0x4000, scoped, tag = 'input window, operand 2, single buffered']
    #allocation8 [shape = 'u8[32768]{0}', space=vmem, size = 0x8000, scoped, tag = 'input window, operand 5, single buffered']
    #allocation9 [shape = 's32[1]{0}', space=sflag, size = 0x4, scoped, tag = 'scoped memory for tpu_custom_call.1']
    #allocation10 [shape = 'u8[32768]{0}', space=vmem, size = 0x8000, scoped, tag = 'input window, operand 6, single buffered']
    #allocation11 [shape = 'u8[32768]{0}', space=vmem, size = 0x8000, scoped, tag = 'input window, operand 9, single buffered']
    #allocation12 [shape = 's32[1]{0}', space=sflag, size = 0x4, scoped, tag = 'scoped memory for tpu_custom_call.1']
    #allocation13 [shape = 'u8[16384]{0}', space=vmem, size = 0x4000, scoped, tag = 'output window, operand 0']
    %16 = vsyncpa [#allocation3], 0
    %s17 = scalar_lea.sflag [#allocation3], 1
    %18 = vsyncpa %s17, 0
    %19 = vsyncpa [#allocation6], 0
    %20 = vsyncpa [#allocation9], 0
    %21 = vsyncpa [#allocation12], 0
    %22 = vsyncpa [#allocation4], 0
    %s23 = scalar_lea.sflag [#allocation4], 1
    %24 = vsyncpa %s23, 0
    loop: start=0, step=1, limit=4
    $region2: #{tpu_custom_call.1} parent=1 // loop_pre_header
      _
    $region3: #{tpu_custom_call.1} parent=1 // loop_header
      %s26 = sphi 0, %s30
      %p27 = scmp.ge.s32.totalorder %s26, 4
      %s36 = sphi 0, %s38
      %s39 = sphi 0, %s36
      %s40 = sphi 0, %s39
      %s56 = sphi 0, %s40
      %s60 = sphi 0, %s60
      %s62 = sphi 0, %s60
      %s63 = sphi 0, %s62
      %s77 = sphi 0, %s63
      %s81 = sphi 0, %s81
      %s83 = sphi 0, %s81
      %s84 = sphi 0, %s83
      %s98 = sphi 0, %s84
      %s102 = sphi 0, %s102
      %s104 = sphi 0, %s102
      %s105 = sphi 0, %s104
      %s119 = sphi 0, %s105
      %s123 = sphi 0, %s123
      %s125 = sphi 0, %s123
      %s126 = sphi 0, %s125
      %s140 = sphi 0, %s126
      %s144 = sphi 0, %s144
      %s146 = sphi 0, %s144
      %s147 = sphi 0, %s146
      %s161 = sphi 0, %s147
      %s165 = sphi 0, %s165
      %s167 = sphi 0, %s165
      %s168 = sphi 0, %s167
      %s182 = sphi 0, %s168
      %s186 = sphi 0, %s186
      %s188 = sphi 0, %s186
      %s189 = sphi 0, %s188
      %s203 = sphi 0, %s189
      %s207 = sphi 0, %s207
      %s209 = sphi 0, %s207
      %s210 = sphi 0, %s209
      %s224 = sphi 0, %s210
      %s228 = sphi 0, %s228
      %s230 = sphi 0, %s228
      %s231 = sphi 0, %s230
      %s245 = sphi 0, %s231
      %s249 = sphi 0, %s249
      %s251 = sphi 0, %s249
      %s252 = sphi 0, %s251
      %s266 = sphi 0, %s252
      %s272 = sphi 0, %s274
      %s275 = sphi 0, %s272
      %s276 = sphi 0, %s275
      %s292 = sphi 0, %s276
    $region4: #{tpu_custom_call.1} parent=1 // loop_header_branch
      %29 = sbr.rel (%p27) target = $region8
    $region5: #{tpu_custom_call.1} parent=1 // loop_body
      %s31 = ssub.s32 %s26, 1
      %s32 = ssub.s32 %s26, 2
      %s33 = sadd.s32 %s26, 1
      %s34 = ssub.s32 %s26, %s33
      %p35 = scmp.eq.s32.totalorder %s34, 0
      %s37 = sadd.s32 %s36, 1
      %s38 = scalar_select %p35, %s36, %s37
      %p41 = pneg %p35
      %p42 = scmp.eq.s32.totalorder %s26, 1
      %p43 = por %p41, %p42
      %p44 = scmp.ne.s32.totalorder %s36, %s39
      %p45 = scmp.eq.s32.totalorder %s26, 0
      %p46 = por %p44, %p45
      %p47 = scmp.ne.s32.totalorder %s36, %s39
      %p48 = scmp.eq.s32.totalorder %s31, 1
      %p49 = por %p47, %p48
      %p50 = scmp.ne.s32.totalorder %s39, %s40
      %p51 = scmp.eq.s32.totalorder %s31, 0
      %p52 = por %p50, %p51
      %p53 = scmp.ne.s32.totalorder %s39, %s40
      %p54 = scmp.eq.s32.totalorder %s32, 1
      %p55 = por %p53, %p54
      %p57 = scmp.ne.s32.totalorder %s40, %s56
      %p58 = scmp.eq.s32.totalorder %s32, 0
      %p59 = por %p57, %p58
      %s61 = sadd.s32 %s60, 1
      %p64 = scmp.eq.s32.totalorder %s26, 1
      %p65 = scmp.ne.s32.totalorder %s60, %s62
      %p66 = scmp.eq.s32.totalorder %s26, 0
      %p67 = por %p65, %p66
      %p68 = scmp.ne.s32.totalorder %s60, %s62
      %p69 = scmp.eq.s32.totalorder %s31, 1
      %p70 = por %p68, %p69
      %p71 = scmp.ne.s32.totalorder %s62, %s63
      %p72 = scmp.eq.s32.totalorder %s31, 0
      %p73 = por %p71, %p72
      %p74 = scmp.ne.s32.totalorder %s62, %s63
      %p75 = scmp.eq.s32.totalorder %s32, 1
      %p76 = por %p74, %p75
      %p78 = scmp.ne.s32.totalorder %s63, %s77
      %p79 = scmp.eq.s32.totalorder %s32, 0
      %p80 = por %p78, %p79
      %s82 = sadd.s32 %s81, 1
      %p85 = scmp.eq.s32.totalorder %s26, 1
      %p86 = scmp.ne.s32.totalorder %s81, %s83
      %p87 = scmp.eq.s32.totalorder %s26, 0
      %p88 = por %p86, %p87
      %p89 = scmp.ne.s32.totalorder %s81, %s83
      %p90 = scmp.eq.s32.totalorder %s31, 1
      %p91 = por %p89, %p90
      %p92 = scmp.ne.s32.totalorder %s83, %s84
      %p93 = scmp.eq.s32.totalorder %s31, 0
      %p94 = por %p92, %p93
      %p95 = scmp.ne.s32.totalorder %s83, %s84
      %p96 = scmp.eq.s32.totalorder %s32, 1
      %p97 = por %p95, %p96
      %p99 = scmp.ne.s32.totalorder %s84, %s98
      %p100 = scmp.eq.s32.totalorder %s32, 0
      %p101 = por %p99, %p100
      %s103 = sadd.s32 %s102, 1
      %p106 = scmp.eq.s32.totalorder %s26, 1
      %p107 = scmp.ne.s32.totalorder %s102, %s104
      %p108 = scmp.eq.s32.totalorder %s26, 0
      %p109 = por %p107, %p108
      %p110 = scmp.ne.s32.totalorder %s102, %s104
      %p111 = scmp.eq.s32.totalorder %s31, 1
      %p112 = por %p110, %p111
      %p113 = scmp.ne.s32.totalorder %s104, %s105
      %p114 = scmp.eq.s32.totalorder %s31, 0
      %p115 = por %p113, %p114
      %p116 = scmp.ne.s32.totalorder %s104, %s105
      %p117 = scmp.eq.s32.totalorder %s32, 1
      %p118 = por %p116, %p117
      %p120 = scmp.ne.s32.totalorder %s105, %s119
      %p121 = scmp.eq.s32.totalorder %s32, 0
      %p122 = por %p120, %p121
      %s124 = sadd.s32 %s123, 1
      %p127 = scmp.eq.s32.totalorder %s26, 1
      %p128 = scmp.ne.s32.totalorder %s123, %s125
      %p129 = scmp.eq.s32.totalorder %s26, 0
      %p130 = por %p128, %p129
      %p131 = scmp.ne.s32.totalorder %s123, %s125
      %p132 = scmp.eq.s32.totalorder %s31, 1
      %p133 = por %p131, %p132
      %p134 = scmp.ne.s32.totalorder %s125, %s126
      %p135 = scmp.eq.s32.totalorder %s31, 0
      %p136 = por %p134, %p135
      %p137 = scmp.ne.s32.totalorder %s125, %s126
      %p138 = scmp.eq.s32.totalorder %s32, 1
      %p139 = por %p137, %p138
      %p141 = scmp.ne.s32.totalorder %s126, %s140
      %p142 = scmp.eq.s32.totalorder %s32, 0
      %p143 = por %p141, %p142
      %s145 = sadd.s32 %s144, 1
      %p148 = scmp.eq.s32.totalorder %s26, 1
      %p149 = scmp.ne.s32.totalorder %s144, %s146
      %p150 = scmp.eq.s32.totalorder %s26, 0
      %p151 = por %p149, %p150
      %p152 = scmp.ne.s32.totalorder %s144, %s146
      %p153 = scmp.eq.s32.totalorder %s31, 1
      %p154 = por %p152, %p153
      %p155 = scmp.ne.s32.totalorder %s146, %s147
      %p156 = scmp.eq.s32.totalorder %s31, 0
      %p157 = por %p155, %p156
      %p158 = scmp.ne.s32.totalorder %s146, %s147
      %p159 = scmp.eq.s32.totalorder %s32, 1
      %p160 = por %p158, %p159
      %p162 = scmp.ne.s32.totalorder %s147, %s161
      %p163 = scmp.eq.s32.totalorder %s32, 0
      %p164 = por %p162, %p163
      %s166 = sadd.s32 %s165, 1
      %p169 = scmp.eq.s32.totalorder %s26, 1
      %p170 = scmp.ne.s32.totalorder %s165, %s167
      %p171 = scmp.eq.s32.totalorder %s26, 0
      %p172 = por %p170, %p171
      %p173 = scmp.ne.s32.totalorder %s165, %s167
      %p174 = scmp.eq.s32.totalorder %s31, 1
      %p175 = por %p173, %p174
      %p176 = scmp.ne.s32.totalorder %s167, %s168
      %p177 = scmp.eq.s32.totalorder %s31, 0
      %p178 = por %p176, %p177
      %p179 = scmp.ne.s32.totalorder %s167, %s168
      %p180 = scmp.eq.s32.totalorder %s32, 1
      %p181 = por %p179, %p180
      %p183 = scmp.ne.s32.totalorder %s168, %s182
      %p184 = scmp.eq.s32.totalorder %s32, 0
      %p185 = por %p183, %p184
      %s187 = sadd.s32 %s186, 1
      %p190 = scmp.eq.s32.totalorder %s26, 1
      %p191 = scmp.ne.s32.totalorder %s186, %s188
      %p192 = scmp.eq.s32.totalorder %s26, 0
      %p193 = por %p191, %p192
      %p194 = scmp.ne.s32.totalorder %s186, %s188
      %p195 = scmp.eq.s32.totalorder %s31, 1
      %p196 = por %p194, %p195
      %p197 = scmp.ne.s32.totalorder %s188, %s189
      %p198 = scmp.eq.s32.totalorder %s31, 0
      %p199 = por %p197, %p198
      %p200 = scmp.ne.s32.totalorder %s188, %s189
      %p201 = scmp.eq.s32.totalorder %s32, 1
      %p202 = por %p200, %p201
      %p204 = scmp.ne.s32.totalorder %s189, %s203
      %p205 = scmp.eq.s32.totalorder %s32, 0
      %p206 = por %p204, %p205
      %s208 = sadd.s32 %s207, 1
      %p211 = scmp.eq.s32.totalorder %s26, 1
      %p212 = scmp.ne.s32.totalorder %s207, %s209
      %p213 = scmp.eq.s32.totalorder %s26, 0
      %p214 = por %p212, %p213
      %p215 = scmp.ne.s32.totalorder %s207, %s209
      %p216 = scmp.eq.s32.totalorder %s31, 1
      %p217 = por %p215, %p216
      %p218 = scmp.ne.s32.totalorder %s209, %s210
      %p219 = scmp.eq.s32.totalorder %s31, 0
      %p220 = por %p218, %p219
      %p221 = scmp.ne.s32.totalorder %s209, %s210
      %p222 = scmp.eq.s32.totalorder %s32, 1
      %p223 = por %p221, %p222
      %p225 = scmp.ne.s32.totalorder %s210, %s224
      %p226 = scmp.eq.s32.totalorder %s32, 0
      %p227 = por %p225, %p226
      %s229 = sadd.s32 %s228, 1
      %p232 = scmp.eq.s32.totalorder %s26, 1
      %p233 = scmp.ne.s32.totalorder %s228, %s230
      %p234 = scmp.eq.s32.totalorder %s26, 0
      %p235 = por %p233, %p234
      %p236 = scmp.ne.s32.totalorder %s228, %s230
      %p237 = scmp.eq.s32.totalorder %s31, 1
      %p238 = por %p236, %p237
      %p239 = scmp.ne.s32.totalorder %s230, %s231
      %p240 = scmp.eq.s32.totalorder %s31, 0
      %p241 = por %p239, %p240
      %p242 = scmp.ne.s32.totalorder %s230, %s231
      %p243 = scmp.eq.s32.totalorder %s32, 1
      %p244 = por %p242, %p243
      %p246 = scmp.ne.s32.totalorder %s231, %s245
      %p247 = scmp.eq.s32.totalorder %s32, 0
      %p248 = por %p246, %p247
      %s250 = sadd.s32 %s249, 1
      %p253 = scmp.eq.s32.totalorder %s26, 1
      %p254 = scmp.ne.s32.totalorder %s249, %s251
      %p255 = scmp.eq.s32.totalorder %s26, 0
      %p256 = por %p254, %p255
      %p257 = scmp.ne.s32.totalorder %s249, %s251
      %p258 = scmp.eq.s32.totalorder %s31, 1
      %p259 = por %p257, %p258
      %p260 = scmp.ne.s32.totalorder %s251, %s252
      %p261 = scmp.eq.s32.totalorder %s31, 0
      %p262 = por %p260, %p261
      %p263 = scmp.ne.s32.totalorder %s251, %s252
      %p264 = scmp.eq.s32.totalorder %s32, 1
      %p265 = por %p263, %p264
      %p267 = scmp.ne.s32.totalorder %s252, %s266
      %p268 = scmp.eq.s32.totalorder %s32, 0
      %p269 = por %p267, %p268
      %s270 = ssub.s32 %s26, %s33
      %p271 = scmp.eq.s32.totalorder %s270, 0
      %s273 = sadd.s32 %s272, 1
      %s274 = scalar_select %p271, %s272, %s273
      %p277 = pneg %p271
      %p278 = scmp.eq.s32.totalorder %s26, 1
      %p279 = por %p277, %p278
      %p280 = scmp.ne.s32.totalorder %s272, %s275
      %p281 = scmp.eq.s32.totalorder %s26, 0
      %p282 = por %p280, %p281
      %p283 = scmp.ne.s32.totalorder %s272, %s275
      %p284 = scmp.eq.s32.totalorder %s31, 1
      %p285 = por %p283, %p284
      %p286 = scmp.ne.s32.totalorder %s275, %s276
      %p287 = scmp.eq.s32.totalorder %s31, 0
      %p288 = por %p286, %p287
      %p289 = scmp.ne.s32.totalorder %s275, %s276
      %p290 = scmp.eq.s32.totalorder %s32, 1
      %p291 = por %p289, %p290
      %p293 = scmp.ne.s32.totalorder %s276, %s292
      %p294 = scmp.eq.s32.totalorder %s32, 0
      %p295 = por %p293, %p294
      %p296 = scmp.le.s32.totalorder 1, %s26
      %p297 = scmp.lt.s32.totalorder %s26, 3
      %p298 = pnand %p296, %p297
      %p299 = pneg %p298
      // Predicated region
      $region9: #{tpu_custom_call.1} parent=5 // pred_check
        _
      $region10: #{tpu_custom_call.1} parent=5 // pred_check_branch
        %301 = sbr.rel (%p298) target = $region12
      $region11: #{tpu_custom_call.1} parent=5 // pred_region
        %s302 = ssub.s32 %s26, 1
        // Predicated region
        $region13: #{tpu_custom_call.1} parent=11 // pred_check
          %p303 = pneg %p73
        $region14: #{tpu_custom_call.1} parent=11 // pred_check_branch
          %305 = sbr.rel (%p303) target = $region16
        $region15: #{tpu_custom_call.1} parent=11 // pred_region
          %s307 = ssub.s32 512, 512
          %308 = vsyncadd [#allocation6], %s307
          %s309 = sshll.u32 [#allocation5], 4
          %s310 = int_to_ptr.vmem [resolvable:$true] %s309
          %315 = dma.hbm_to_vmem [thread:$0]  %s1, 512, %s310, [#allocation6], 64, 64, 4
        $region16: #{tpu_custom_call.1} parent=11 // pred_fallthru
          _
        // Predicated region
        $region17: #{tpu_custom_call.1} parent=11 // pred_check
          %p316 = pneg %p94
        $region18: #{tpu_custom_call.1} parent=11 // pred_check_branch
          %318 = sbr.rel (%p316) target = $region20
        $region19: #{tpu_custom_call.1} parent=11 // pred_region
          %s320 = ssub.s32 512, 512
          %321 = vsyncadd [#allocation6], %s320
          %s322 = sshll.u32 [#allocation7], 4
          %s323 = int_to_ptr.vmem [resolvable:$true] %s322
          %328 = dma.hbm_to_vmem [thread:$0]  %s2, 512, %s323, [#allocation6], 64, 64, 4
        $region20: #{tpu_custom_call.1} parent=11 // pred_fallthru
          _
        // Predicated region
        $region21: #{tpu_custom_call.1} parent=11 // pred_check
          %p329 = pneg %p115
        $region22: #{tpu_custom_call.1} parent=11 // pred_check_branch
          %331 = sbr.rel (%p329) target = $region24
        $region23: #{tpu_custom_call.1} parent=11 // pred_region
          _
        $region24: #{tpu_custom_call.1} parent=11 // pred_fallthru
          _
        // Predicated region
        $region25: #{tpu_custom_call.1} parent=11 // pred_check
          %p332 = pneg %p136
        $region26: #{tpu_custom_call.1} parent=11 // pred_check_branch
          %334 = sbr.rel (%p332) target = $region28
        $region27: #{tpu_custom_call.1} parent=11 // pred_region
          _
        $region28: #{tpu_custom_call.1} parent=11 // pred_fallthru
          _
        // Predicated region
        $region29: #{tpu_custom_call.1} parent=11 // pred_check
          %p335 = pneg %p157
        $region30: #{tpu_custom_call.1} parent=11 // pred_check_branch
          %337 = sbr.rel (%p335) target = $region32
        $region31: #{tpu_custom_call.1} parent=11 // pred_region
          %s339 = ssub.s32 1024, 1024
          %340 = vsyncadd [#allocation9], %s339
          %s341 = sshll.u32 [#allocation8], 4
          %s342 = int_to_ptr.vmem [resolvable:$true] %s341
          %347 = dma.hbm_to_vmem [thread:$0]  %s5, 1024, %s342, [#allocation9], 64, 64, 4
        $region32: #{tpu_custom_call.1} parent=11 // pred_fallthru
          _
        // Predicated region
        $region33: #{tpu_custom_call.1} parent=11 // pred_check
          %p348 = pneg %p178
        $region34: #{tpu_custom_call.1} parent=11 // pred_check_branch
          %350 = sbr.rel (%p348) target = $region36
        $region35: #{tpu_custom_call.1} parent=11 // pred_region
          %s352 = ssub.s32 1024, 1024
          %353 = vsyncadd [#allocation9], %s352
          %s354 = sshll.u32 [#allocation10], 4
          %s355 = int_to_ptr.vmem [resolvable:$true] %s354
          %360 = dma.hbm_to_vmem [thread:$0]  %s6, 1024, %s355, [#allocation9], 64, 64, 4
        $region36: #{tpu_custom_call.1} parent=11 // pred_fallthru
          _
        // Predicated region
        $region37: #{tpu_custom_call.1} parent=11 // pred_check
          %p361 = pneg %p199
        $region38: #{tpu_custom_call.1} parent=11 // pred_check_branch
          %363 = sbr.rel (%p361) target = $region40
        $region39: #{tpu_custom_call.1} parent=11 // pred_region
          _
        $region40: #{tpu_custom_call.1} parent=11 // pred_fallthru
          _
        // Predicated region
        $region41: #{tpu_custom_call.1} parent=11 // pred_check
          %p364 = pneg %p220
        $region42: #{tpu_custom_call.1} parent=11 // pred_check_branch
          %366 = sbr.rel (%p364) target = $region44
        $region43: #{tpu_custom_call.1} parent=11 // pred_region
          _
        $region44: #{tpu_custom_call.1} parent=11 // pred_fallthru
          _
        // Predicated region
        $region45: #{tpu_custom_call.1} parent=11 // pred_check
          %p367 = pneg %p241
        $region46: #{tpu_custom_call.1} parent=11 // pred_check_branch
          %369 = sbr.rel (%p367) target = $region48
        $region47: #{tpu_custom_call.1} parent=11 // pred_region
          %s371 = ssub.s32 1024, 1024
          %372 = vsyncadd [#allocation12], %s371
          %s373 = sshll.u32 [#allocation11], 4
          %s374 = int_to_ptr.vmem [resolvable:$true] %s373
          %379 = dma.hbm_to_vmem [thread:$0]  %s9, 1024, %s374, [#allocation12], 64, 64, 4
        $region48: #{tpu_custom_call.1} parent=11 // pred_fallthru
          _
        // Predicated region
        $region49: #{tpu_custom_call.1} parent=11 // pred_check
          %p380 = pneg %p262
        $region50: #{tpu_custom_call.1} parent=11 // pred_check_branch
          %382 = sbr.rel (%p380) target = $region52
        $region51: #{tpu_custom_call.1} parent=11 // pred_region
          _
        $region52: #{tpu_custom_call.1} parent=11 // pred_fallthru
          _
      $region12: #{tpu_custom_call.1} parent=5 // pred_fallthru
        _
      %p383 = scmp.lt.s32.totalorder %s26, 2
      // Predicated region
      $region53: #{tpu_custom_call.1} parent=5 // pred_check
        %p384 = pneg %p383
      $region54: #{tpu_custom_call.1} parent=5 // pred_check_branch
        %386 = sbr.rel (%p384) target = $region56
      $region55: #{tpu_custom_call.1} parent=5 // pred_region
        // Predicated region
        $region57: #{tpu_custom_call.1} parent=55 // pred_check
          %p387 = pneg %p46
        $region58: #{tpu_custom_call.1} parent=55 // pred_check_branch
          %389 = sbr.rel (%p387) target = $region60
        $region59: #{tpu_custom_call.1} parent=55 // pred_region
          %s390 = sand.u32 %s36, 1
          %s391 = scalar_lea.sflag [#allocation3], %s390
          %s392 = sand.u32 %s36, 1
          %s393 = smul.addr %s392, 32
          %s394 = scalar_lea.vmem [#allocation2], %s393
          %s396 = ssub.s32 512, 512
          %397 = vsyncadd %s391, %s396
          %s398 = smul.addr %s26, 4
          %s399 = smul.addr %s398, 128
          %s400 = scalar_lea.hbm %s0, %s399
          %s401 = sshll.u32 %s394, 4
          %s402 = int_to_ptr.vmem [resolvable:$true] %s401
          %407 = dma.hbm_to_vmem [thread:$0]  %s400, 512, %s402, %s391, 128, 128, 8
        $region60: #{tpu_custom_call.1} parent=55 // pred_fallthru
          _
      $region56: #{tpu_custom_call.1} parent=5 // pred_fallthru
        _
      %p408 = scmp.le.s32.totalorder 1, %s26
      %p409 = scmp.lt.s32.totalorder %s26, 3
      %p410 = pnand %p408, %p409
      %p411 = pneg %p410
      // Predicated region
      $region61: #{tpu_custom_call.1} parent=5 // pred_check
        _
      $region62: #{tpu_custom_call.1} parent=5 // pred_check_branch
        %413 = sbr.rel (%p410) target = $region64
      $region63: #{tpu_custom_call.1} parent=5 // pred_region
        %s414 = ssub.s32 %s26, 1
        %s415 = sand.u32 %s39, 1
        %s416 = scalar_lea.sflag [#allocation3], %s415
        %s417 = sand.u32 %s39, 1
        %s418 = smul.addr %s417, 32
        %s419 = scalar_lea.vmem [#allocation2], %s418
        // Predicated region
        $region65: #{tpu_custom_call.1} parent=63 // pred_check
          %p420 = pneg %p52
        $region66: #{tpu_custom_call.1} parent=63 // pred_check_branch
          %422 = sbr.rel (%p420) target = $region68
        $region67: #{tpu_custom_call.1} parent=63 // pred_region
          %423 = dma.done %s416, 512
        $region68: #{tpu_custom_call.1} parent=63 // pred_fallthru
          _
        // Predicated region
        $region69: #{tpu_custom_call.1} parent=63 // pred_check
          %p424 = pneg %p73
        $region70: #{tpu_custom_call.1} parent=63 // pred_check_branch
          %426 = sbr.rel (%p424) target = $region72
        $region71: #{tpu_custom_call.1} parent=63 // pred_region
          %427 = dma.done [#allocation6], 512
        $region72: #{tpu_custom_call.1} parent=63 // pred_fallthru
          _
        // Predicated region
        $region73: #{tpu_custom_call.1} parent=63 // pred_check
          %p428 = pneg %p94
        $region74: #{tpu_custom_call.1} parent=63 // pred_check_branch
          %430 = sbr.rel (%p428) target = $region76
        $region75: #{tpu_custom_call.1} parent=63 // pred_region
          %431 = dma.done [#allocation6], 512
        $region76: #{tpu_custom_call.1} parent=63 // pred_fallthru
          _
        // Predicated region
        $region77: #{tpu_custom_call.1} parent=63 // pred_check
          %p432 = pneg %p157
        $region78: #{tpu_custom_call.1} parent=63 // pred_check_branch
          %434 = sbr.rel (%p432) target = $region80
        $region79: #{tpu_custom_call.1} parent=63 // pred_region
          %435 = dma.done [#allocation9], 1024
        $region80: #{tpu_custom_call.1} parent=63 // pred_fallthru
          _
        // Predicated region
        $region81: #{tpu_custom_call.1} parent=63 // pred_check
          %p436 = pneg %p178
        $region82: #{tpu_custom_call.1} parent=63 // pred_check_branch
          %438 = sbr.rel (%p436) target = $region84
        $region83: #{tpu_custom_call.1} parent=63 // pred_region
          %439 = dma.done [#allocation9], 1024
        $region84: #{tpu_custom_call.1} parent=63 // pred_fallthru
          _
        // Predicated region
        $region85: #{tpu_custom_call.1} parent=63 // pred_check
          %p440 = pneg %p241
        $region86: #{tpu_custom_call.1} parent=63 // pred_check_branch
          %442 = sbr.rel (%p440) target = $region88
        $region87: #{tpu_custom_call.1} parent=63 // pred_region
          %443 = dma.done [#allocation12], 1024
        $region88: #{tpu_custom_call.1} parent=63 // pred_fallthru
          _
        %s444 = sand.u32 %s39, 1
        %s445 = scalar_lea.sflag [#allocation3], %s444
        %s446 = sand.u32 %s39, 1
        %s447 = smul.addr %s446, 32
        %s448 = scalar_lea.vmem [#allocation2], %s447
        %p449 = pneg %p52
        %p450 = pneg %p49
        %p451 = pneg %p73
        %p452 = pneg %p70
        %p453 = pneg %p94
        %p454 = pneg %p91
        %p455 = pneg %p115
        %p456 = pneg %p112
        %p457 = pneg %p136
        %p458 = pneg %p133
        %p459 = pneg %p157
        %p460 = pneg %p154
        %p461 = pneg %p178
        %p462 = pneg %p175
        %p463 = pneg %p199
        %p464 = pneg %p196
        %p465 = pneg %p220
        %p466 = pneg %p217
        %p467 = pneg %p241
        %p468 = pneg %p238
        %p469 = pneg %p262
        %p470 = pneg %p259
        %p471 = pneg %p288
        %p472 = pneg %p285
        %s473 = sand.u32 %s275, 1
        %s474 = scalar_lea.sflag [#allocation4], %s473
        %s475 = sand.u32 %s275, 1
        %s476 = smul.addr %s475, 16
        %s477 = scalar_lea.vmem [#allocation13], %s476
        %v479 = vld [vmem:[%s419] sm:$0xff]
        %v480 = vld [vmem:[%s419 + $0x8] sm:$0xff]
        %v481 = vld [vmem:[%s419 + $0x10] sm:$0xff]
        %v482 = vld [vmem:[%s419 + $0x18] sm:$0xff]
        %v483 = vpack.c.bf16 %v480, %v479
        %v484 = vpack.c.bf16 %v482, %v481
        %v485 = vld [vmem:[#allocation7] sm:$0xf]
        %v486 = vld [vmem:[#allocation7 + $0x4] sm:$0xf]
        %v487 = vld [vmem:[#allocation7 + $0x8] sm:$0xf]
        %v488 = vld [vmem:[#allocation7 + $0xc] sm:$0xf]
        %v489 = vld [vmem:[#allocation7 + $0x10] sm:$0xf]
        %v490 = vld [vmem:[#allocation7 + $0x14] sm:$0xf]
        %v491 = vld [vmem:[#allocation7 + $0x18] sm:$0xf]
        %v492 = vld [vmem:[#allocation7 + $0x1c] sm:$0xf]
        %v501 = vunpack.c.l.b16 %v485
        %v502 = vunpack.c.l.b16 %v486
        %v503 = vunpack.c.l.b16 %v487
        %v504 = vunpack.c.l.b16 %v488
        %v505 = vunpack.c.l.b16 %v489
        %v506 = vunpack.c.l.b16 %v490
        %v507 = vunpack.c.l.b16 %v491
        %v508 = vunpack.c.l.b16 %v492
        %v509 = vpack.c.b16 %v502, %v501
        %v510 = vpack.c.b16 %v504, %v503
        %v511 = vpack.c.b16 %v506, %v505
        %v512 = vpack.c.b16 %v508, %v507
        %vm517 = vcmask 523264
        %v519 = vsel %vm517, %v483, 0
        %v522 = vsel %vm517, %v484, 0
        %524 = vmatprep.subr.bf16.mxu0 0
        %525 = vmatpush1.bf16.msra.mxu0 %v509
        %526 = vmatprep.subr.bf16.mxu0 0
        %527 = vmatpush1.bf16.msra.mxu0 %v510
        %528 = vmatprep.subr.bf16.mxu0 0
        %529 = vmatpush1.bf16.msra.mxu0 %v511
        %530 = vmatprep.subr.bf16.mxu0 0
        %531 = vmatpush1.bf16.msra.mxu0 %v512
        %532 = vmatprep.subr.bf16.mxu0 0
        %533 = vmatpush1.bf16.msra.mxu0 0
        %534 = vmatprep.subr.bf16.mxu0 0
        %535 = vmatpush1.bf16.msra.mxu0 0
        %536 = vmatprep.subr.bf16.mxu0 0
        %537 = vmatpush1.bf16.msra.mxu0 0
        %538 = vmatprep.subr.bf16.mxu0 0
        %539 = vmatpush1.bf16.msra.mxu0 0
        %540 = vmatprep.subr.bf16.mxu0 0
        %541 = vmatpush1.bf16.msra.mxu0 0
        %542 = vmatprep.subr.bf16.mxu0 0
        %543 = vmatpush1.bf16.msra.mxu0 0
        %544 = vmatprep.subr.bf16.mxu0 0
        %545 = vmatpush1.bf16.msra.mxu0 0
        %546 = vmatprep.subr.bf16.mxu0 0
        %547 = vmatpush1.bf16.msra.mxu0 0
        %548 = vmatprep.subr.bf16.mxu0 0
        %549 = vmatpush1.bf16.msra.mxu0 0
        %550 = vmatprep.subr.bf16.mxu0 0
        %551 = vmatpush1.bf16.msra.mxu0 0
        %552 = vmatprep.subr.bf16.mxu0 0
        %553 = vmatpush1.bf16.msra.mxu0 0
        %554 = vmatprep.subr.bf16.mxu0 0
        %555 = vmatpush1.bf16.msra.mxu0 0
        %556 = vmatprep.mubr.bf16.mxu0 0
        %557 = vmatmul.mubr.bf16.gmra.mrb[0].mxu0 %v519
        %v558 = vpop.f32.mrb[0].mxu0
        %v559 = vadd.f32 0.0, %v558
        %v560 = vpop.f32.mrb[0].mxu0
        %v561 = vpop.f32.mrb[0].mxu0
        %v562 = vadd.f32 0.0, %v561
        %v563 = vpop.f32.mrb[0].mxu0
        %564 = vmatprep.mubr.bf16.mxu0 0
        %565 = vmatmul.mubr.bf16.gmra.mrb[0].mxu0 %v522
        %v566 = vpop.f32.mrb[0].mxu0
        %v567 = vadd.f32 0.0, %v566
        %v568 = vpop.f32.mrb[0].mxu0
        %v569 = vpop.f32.mrb[0].mxu0
        %v570 = vadd.f32 0.0, %v569
        %v571 = vpop.f32.mrb[0].mxu0
        %572 = vdwg.mxu0
        %v573 = vld [vmem:[%s3] sm:$0x1]
        %v574 = vld [vmem:[%s4] sm:$0x1]
        %575 = vadd.xlane.f32.xlu0 %v559
        %v576 = vpop.xlane.xlu0 %575
        %577 = vadd.xlane.f32.xlu0 %v562
        %v578 = vpop.xlane.xlu0 %577
        %579 = vadd.xlane.f32.xlu0 %v567
        %v580 = vpop.xlane.xlu0 %579
        %581 = vadd.xlane.f32.xlu0 %v570
        %v582 = vpop.xlane.xlu0 %581
        %v583 = vrcp.pop 128.0
        %v584 = vmul.f32 %v576, %v583
        %v585 = vmul.f32 %v578, %v583
        %v586 = vmul.f32 %v580, %v583
        %v587 = vmul.f32 %v582, %v583
        %v588 = vmul.f32 %v559, %v559
        %v589 = vmul.f32 %v562, %v562
        %v590 = vmul.f32 %v567, %v567
        %v591 = vmul.f32 %v570, %v570
        %592 = vadd.xlane.f32.xlu0 %v588
        %v593 = vpop.xlane.xlu0 %592
        %594 = vadd.xlane.f32.xlu0 %v589
        %v595 = vpop.xlane.xlu0 %594
        %596 = vadd.xlane.f32.xlu0 %v590
        %v597 = vpop.xlane.xlu0 %596
        %598 = vadd.xlane.f32.xlu0 %v591
        %v599 = vpop.xlane.xlu0 %598
        %v600 = vmul.f32 %v593, %v583
        %v601 = vmul.f32 %v595, %v583
        %v602 = vmul.f32 %v597, %v583
        %v603 = vmul.f32 %v599, %v583
        %v604 = vmul.f32 %v584, %v584
        %v605 = vmul.f32 %v585, %v585
        %v606 = vmul.f32 %v586, %v586
        %v607 = vmul.f32 %v587, %v587
        %v608 = vsub.f32 %v600, %v604
        %v609 = vsub.f32 %v601, %v605
        %v610 = vsub.f32 %v602, %v606
        %v611 = vsub.f32 %v603, %v607
        %v612 = vsub.f32 %v559, %v584
        %v613 = vsub.f32 %v562, %v585
        %v614 = vsub.f32 %v567, %v586
        %v615 = vsub.f32 %v570, %v587
        %v616 = vadd.f32 %v608, 1e-05
        %v617 = vadd.f32 %v609, 1e-05
        %v618 = vadd.f32 %v610, 1e-05
        %v619 = vadd.f32 %v611, 1e-05
        %v620 = vrsqrt.pop %v616
        %v621 = vrsqrt.pop %v617
        %v622 = vrsqrt.pop %v618
        %v623 = vrsqrt.pop %v619
        %v624 = vmul.f32 %v612, %v620
        %v625 = vmul.f32 %v613, %v621
        %v626 = vmul.f32 %v614, %v622
        %v627 = vmul.f32 %v615, %v623
        %v629 = vlaneseq
        %v630 = vshrl.u32 %v629, 7
        %v631 = vsub.s32 0, %v630
        %v632 = vrot.slane %v573, %v631
        %v634 = vmul.f32 %v624, %v632
        %v635 = vmul.f32 %v625, %v632
        %v636 = vmul.f32 %v626, %v632
        %v637 = vmul.f32 %v627, %v632
        %v639 = vlaneseq
        %v640 = vshrl.u32 %v639, 7
        %v641 = vsub.s32 0, %v640
        %v642 = vrot.slane %v574, %v641
        %v644 = vadd.f32 %v634, %v642
        %v645 = vadd.f32 %v635, %v642
        %v646 = vadd.f32 %v636, %v642
        %v647 = vadd.f32 %v637, %v642
        %v648 = vpack.c.bf16 %v645, %v644
        %v649 = vpack.c.bf16 %v647, %v646
        %v650 = vld [vmem:[#allocation8] sm:$0xf]
        %v651 = vld [vmem:[#allocation8 + $0x4] sm:$0xf]
        %v652 = vld [vmem:[#allocation8 + $0x8] sm:$0xf]
        %v653 = vld [vmem:[#allocation8 + $0xc] sm:$0xf]
        %v654 = vld [vmem:[#allocation8 + $0x10] sm:$0xf]
        %v655 = vld [vmem:[#allocation8 + $0x14] sm:$0xf]
        %v656 = vld [vmem:[#allocation8 + $0x18] sm:$0xf]
        %v657 = vld [vmem:[#allocation8 + $0x1c] sm:$0xf]
        %v658 = vld [vmem:[#allocation8 + $0x20] sm:$0xf]
        %v659 = vld [vmem:[#allocation8 + $0x24] sm:$0xf]
        %v660 = vld [vmem:[#allocation8 + $0x28] sm:$0xf]
        %v661 = vld [vmem:[#allocation8 + $0x2c] sm:$0xf]
        %v662 = vld [vmem:[#allocation8 + $0x30] sm:$0xf]
        %v663 = vld [vmem:[#allocation8 + $0x34] sm:$0xf]
        %v664 = vld [vmem:[#allocation8 + $0x38] sm:$0xf]
        %v665 = vld [vmem:[#allocation8 + $0x3c] sm:$0xf]
        %v666 = vld [vmem:[%s7] sm:$0x1]
        %v668 = vlaneseq
        %v669 = vshrl.u32 %v668, 7
        %v670 = vsub.s32 0, %v669
        %v671 = vrot.slane %v666, %v670
        %v689 = vunpack.c.l.b16 %v650
        %v690 = vunpack.c.l.b16 %v651
        %v691 = vunpack.c.l.b16 %v652
        %v692 = vunpack.c.l.b16 %v653
        %v693 = vunpack.c.l.b16 %v654
        %v694 = vunpack.c.l.b16 %v655
        %v695 = vunpack.c.l.b16 %v656
        %v696 = vunpack.c.l.b16 %v657
        %v697 = vunpack.c.l.b16 %v658
        %v698 = vunpack.c.l.b16 %v659
        %v699 = vunpack.c.l.b16 %v660
        %v700 = vunpack.c.l.b16 %v661
        %v701 = vunpack.c.l.b16 %v662
        %v702 = vunpack.c.l.b16 %v663
        %v703 = vunpack.c.l.b16 %v664
        %v704 = vunpack.c.l.b16 %v665
        %v705 = vpack.c.b16 %v690, %v689
        %v706 = vpack.c.b16 %v692, %v691
        %v707 = vpack.c.b16 %v694, %v693
        %v708 = vpack.c.b16 %v696, %v695
        %v709 = vpack.c.b16 %v698, %v697
        %v710 = vpack.c.b16 %v700, %v699
        %v711 = vpack.c.b16 %v702, %v701
        %v712 = vpack.c.b16 %v704, %v703
        %721 = vmatprep.subr.bf16.mxu0 0
        %722 = vmatpush1.bf16.msra.mxu0 %v705
        %723 = vmatprep.subr.bf16.mxu0 0
        %724 = vmatpush1.bf16.msra.mxu0 %v706
        %725 = vmatprep.subr.bf16.mxu0 0
        %726 = vmatpush1.bf16.msra.mxu0 %v707
        %727 = vmatprep.subr.bf16.mxu0 0
        %728 = vmatpush1.bf16.msra.mxu0 %v708
        %729 = vmatprep.subr.bf16.mxu0 0
        %730 = vmatpush1.bf16.msra.mxu0 %v709
        %731 = vmatprep.subr.bf16.mxu0 0
        %732 = vmatpush1.bf16.msra.mxu0 %v710
        %733 = vmatprep.subr.bf16.mxu0 0
        %734 = vmatpush1.bf16.msra.mxu0 %v711
        %735 = vmatprep.subr.bf16.mxu0 0
        %736 = vmatpush1.bf16.msra.mxu0 %v712
        %737 = vmatprep.subr.bf16.mxu0 0
        %738 = vmatpush1.bf16.msra.mxu0 0
        %739 = vmatprep.subr.bf16.mxu0 0
        %740 = vmatpush1.bf16.msra.mxu0 0
        %741 = vmatprep.subr.bf16.mxu0 0
        %742 = vmatpush1.bf16.msra.mxu0 0
        %743 = vmatprep.subr.bf16.mxu0 0
        %744 = vmatpush1.bf16.msra.mxu0 0
        %745 = vmatprep.subr.bf16.mxu0 0
        %746 = vmatpush1.bf16.msra.mxu0 0
        %747 = vmatprep.subr.bf16.mxu0 0
        %748 = vmatpush1.bf16.msra.mxu0 0
        %749 = vmatprep.subr.bf16.mxu0 0
        %750 = vmatpush1.bf16.msra.mxu0 0
        %751 = vmatprep.subr.bf16.mxu0 0
        %752 = vmatpush1.bf16.msra.mxu0 0
        %753 = vmatprep.mubr.bf16.mxu0 0
        %754 = vmatmul.mubr.bf16.gmra.mrb[0].mxu0 %v648
        %v755 = vpop.f32.mrb[0].mxu0
        %v756 = vadd.f32 %v671, %v755
        %v757 = vpop.f32.mrb[0].mxu0
        %v758 = vpop.f32.mrb[0].mxu0
        %v759 = vadd.f32 %v671, %v758
        %v760 = vpop.f32.mrb[0].mxu0
        %761 = vmatprep.mubr.bf16.mxu0 0
        %762 = vmatmul.mubr.bf16.gmra.mrb[0].mxu0 %v649
        %v763 = vpop.f32.mrb[0].mxu0
        %v764 = vadd.f32 %v671, %v763
        %v765 = vpop.f32.mrb[0].mxu0
        %v766 = vpop.f32.mrb[0].mxu0
        %v767 = vadd.f32 %v671, %v766
        %v768 = vpop.f32.mrb[0].mxu0
        %769 = vdwg.mxu0
        %v770 = vpack.c.bf16 %v759, %v756
        %v771 = vpack.c.bf16 %v767, %v764
        %v772 = vld [vmem:[#allocation10] sm:$0xf]
        %v773 = vld [vmem:[#allocation10 + $0x4] sm:$0xf]
        %v774 = vld [vmem:[#allocation10 + $0x8] sm:$0xf]
        %v775 = vld [vmem:[#allocation10 + $0xc] sm:$0xf]
        %v776 = vld [vmem:[#allocation10 + $0x10] sm:$0xf]
        %v777 = vld [vmem:[#allocation10 + $0x14] sm:$0xf]
        %v778 = vld [vmem:[#allocation10 + $0x18] sm:$0xf]
        %v779 = vld [vmem:[#allocation10 + $0x1c] sm:$0xf]
        %v780 = vld [vmem:[#allocation10 + $0x20] sm:$0xf]
        %v781 = vld [vmem:[#allocation10 + $0x24] sm:$0xf]
        %v782 = vld [vmem:[#allocation10 + $0x28] sm:$0xf]
        %v783 = vld [vmem:[#allocation10 + $0x2c] sm:$0xf]
        %v784 = vld [vmem:[#allocation10 + $0x30] sm:$0xf]
        %v785 = vld [vmem:[#allocation10 + $0x34] sm:$0xf]
        %v786 = vld [vmem:[#allocation10 + $0x38] sm:$0xf]
        %v787 = vld [vmem:[#allocation10 + $0x3c] sm:$0xf]
        %v788 = vld [vmem:[%s8] sm:$0x1]
        %v790 = vlaneseq
        %v791 = vshrl.u32 %v790, 7
        %v792 = vsub.s32 0, %v791
        %v793 = vrot.slane %v788, %v792
        %v811 = vunpack.c.l.b16 %v772
        %v812 = vunpack.c.l.b16 %v773
        %v813 = vunpack.c.l.b16 %v774
        %v814 = vunpack.c.l.b16 %v775
        %v815 = vunpack.c.l.b16 %v776
        %v816 = vunpack.c.l.b16 %v777
        %v817 = vunpack.c.l.b16 %v778
        %v818 = vunpack.c.l.b16 %v779
        %v819 = vunpack.c.l.b16 %v780
        %v820 = vunpack.c.l.b16 %v781
        %v821 = vunpack.c.l.b16 %v782
        %v822 = vunpack.c.l.b16 %v783
        %v823 = vunpack.c.l.b16 %v784
        %v824 = vunpack.c.l.b16 %v785
        %v825 = vunpack.c.l.b16 %v786
        %v826 = vunpack.c.l.b16 %v787
        %v827 = vpack.c.b16 %v812, %v811
        %v828 = vpack.c.b16 %v814, %v813
        %v829 = vpack.c.b16 %v816, %v815
        %v830 = vpack.c.b16 %v818, %v817
        %v831 = vpack.c.b16 %v820, %v819
        %v832 = vpack.c.b16 %v822, %v821
        %v833 = vpack.c.b16 %v824, %v823
        %v834 = vpack.c.b16 %v826, %v825
        %843 = vmatprep.subr.bf16.mxu0 0
        %844 = vmatpush1.bf16.msra.mxu0 %v827
        %845 = vmatprep.subr.bf16.mxu0 0
        %846 = vmatpush1.bf16.msra.mxu0 %v828
        %847 = vmatprep.subr.bf16.mxu0 0
        %848 = vmatpush1.bf16.msra.mxu0 %v829
        %849 = vmatprep.subr.bf16.mxu0 0
        %850 = vmatpush1.bf16.msra.mxu0 %v830
        %851 = vmatprep.subr.bf16.mxu0 0
        %852 = vmatpush1.bf16.msra.mxu0 %v831
        %853 = vmatprep.subr.bf16.mxu0 0
        %854 = vmatpush1.bf16.msra.mxu0 %v832
        %855 = vmatprep.subr.bf16.mxu0 0
        %856 = vmatpush1.bf16.msra.mxu0 %v833
        %857 = vmatprep.subr.bf16.mxu0 0
        %858 = vmatpush1.bf16.msra.mxu0 %v834
        %859 = vmatprep.subr.bf16.mxu0 0
        %860 = vmatpush1.bf16.msra.mxu0 0
        %861 = vmatprep.subr.bf16.mxu0 0
        %862 = vmatpush1.bf16.msra.mxu0 0
        %863 = vmatprep.subr.bf16.mxu0 0
        %864 = vmatpush1.bf16.msra.mxu0 0
        %865 = vmatprep.subr.bf16.mxu0 0
        %866 = vmatpush1.bf16.msra.mxu0 0
        %867 = vmatprep.subr.bf16.mxu0 0
        %868 = vmatpush1.bf16.msra.mxu0 0
        %869 = vmatprep.subr.bf16.mxu0 0
        %870 = vmatpush1.bf16.msra.mxu0 0
        %871 = vmatprep.subr.bf16.mxu0 0
        %872 = vmatpush1.bf16.msra.mxu0 0
        %873 = vmatprep.subr.bf16.mxu0 0
        %874 = vmatpush1.bf16.msra.mxu0 0
        %875 = vmatprep.mubr.bf16.mxu0 0
        %876 = vmatmul.mubr.bf16.gmra.mrb[0].mxu0 %v648
        %v877 = vpop.f32.mrb[0].mxu0
        %v878 = vadd.f32 %v793, %v877
        %v879 = vpop.f32.mrb[0].mxu0
        %v880 = vpop.f32.mrb[0].mxu0
        %v881 = vadd.f32 %v793, %v880
        %v882 = vpop.f32.mrb[0].mxu0
        %883 = vmatprep.mubr.bf16.mxu0 0
        %884 = vmatmul.mubr.bf16.gmra.mrb[0].mxu0 %v649
        %v885 = vpop.f32.mrb[0].mxu0
        %v886 = vadd.f32 %v793, %v885
        %v887 = vpop.f32.mrb[0].mxu0
        %v888 = vpop.f32.mrb[0].mxu0
        %v889 = vadd.f32 %v793, %v888
        %v890 = vpop.f32.mrb[0].mxu0
        %891 = vdwg.mxu0
        %v892 = vpack.c.bf16 %v881, %v878
        %v893 = vpack.c.bf16 %v889, %v886
        %896 = vrot.lane.b32.xlu0 %v770, 96
        %v897 = vpop.permute.xlu0 %896
        %898 = vrot.lane.b32.xlu0 %v771, 96
        %v899 = vpop.permute.xlu0 %898
        %900 = vrot.lane.b32.xlu0 %v770, 64
        %v901 = vpop.permute.xlu0 %900
        %902 = vrot.lane.b32.xlu0 %v771, 64
        %v903 = vpop.permute.xlu0 %902
        %904 = vrot.lane.b32.xlu0 %v770, 32
        %v905 = vpop.permute.xlu0 %904
        %906 = vrot.lane.b32.xlu0 %v771, 32
        %v907 = vpop.permute.xlu0 %906
        %910 = vrot.lane.b32.xlu0 %v892, 96
        %v911 = vpop.permute.xlu0 %910
        %912 = vrot.lane.b32.xlu0 %v893, 96
        %v913 = vpop.permute.xlu0 %912
        %916 = vrot.lane.b32.xlu0 %v892, 64
        %v917 = vpop.permute.xlu0 %916
        %918 = vrot.lane.b32.xlu0 %v893, 64
        %v919 = vpop.permute.xlu0 %918
        %922 = vrot.lane.b32.xlu0 %v892, 32
        %v923 = vpop.permute.xlu0 %922
        %924 = vrot.lane.b32.xlu0 %v893, 32
        %v925 = vpop.permute.xlu0 %924
        %v928 = vld [vmem:[#allocation5] sm:$0xf]
        %v929 = vld [vmem:[#allocation5 + $0x4] sm:$0xf]
        %v930 = vld [vmem:[#allocation5 + $0x8] sm:$0xf]
        %v931 = vld [vmem:[#allocation5 + $0xc] sm:$0xf]
        %v932 = vld [vmem:[#allocation5 + $0x10] sm:$0xf]
        %v933 = vld [vmem:[#allocation5 + $0x14] sm:$0xf]
        %v934 = vld [vmem:[#allocation5 + $0x18] sm:$0xf]
        %v935 = vld [vmem:[#allocation5 + $0x1c] sm:$0xf]
        %v938 = vunpack.c.l.b16 %v928
        %v939 = vunpack.c.l.b16 %v929
        %v940 = vpack.c.b16 %v939, %v938
        %vm941 = vcmask 261120
        %v943 = vsel %vm941, %v940, 0
        %v946 = vsel %vm941, %v770, 0
        %v949 = vsel %vm941, %v771, 0
        %951 = vmatprep.subr.bf16.mxu0 0
        %952 = vmatpush1.bf16.xpose.msra.mxu0 %v946
        %953 = vmatprep.subr.bf16.mxu0 0
        %954 = vmatpush1.bf16.xpose.msra.mxu0 %v949
        %955 = vmatprep.subr.bf16.mxu0 0
        %956 = vmatpush1.bf16.xpose.msra.mxu0 0
        %957 = vmatprep.subr.bf16.mxu0 0
        %958 = vmatpush1.bf16.xpose.msra.mxu0 0
        %959 = vmatprep.subr.bf16.mxu0 0
        %960 = vmatpush1.bf16.xpose.msra.mxu0 0
        %961 = vmatprep.subr.bf16.mxu0 0
        %962 = vmatpush1.bf16.xpose.msra.mxu0 0
        %963 = vmatprep.subr.bf16.mxu0 0
        %964 = vmatpush1.bf16.xpose.msra.mxu0 0
        %965 = vmatprep.subr.bf16.mxu0 0
        %966 = vmatpush1.bf16.xpose.msra.mxu0 0
        %967 = vmatprep.subr.bf16.mxu0 0
        %968 = vmatpush1.bf16.xpose.msra.mxu0 0
        %969 = vmatprep.subr.bf16.mxu0 0
        %970 = vmatpush1.bf16.xpose.msra.mxu0 0
        %971 = vmatprep.subr.bf16.mxu0 0
        %972 = vmatpush1.bf16.xpose.msra.mxu0 0
        %973 = vmatprep.subr.bf16.mxu0 0
        %974 = vmatpush1.bf16.xpose.msra.mxu0 0
        %975 = vmatprep.subr.bf16.mxu0 0
        %976 = vmatpush1.bf16.xpose.msra.mxu0 0
        %977 = vmatprep.subr.bf16.mxu0 0
        %978 = vmatpush1.bf16.xpose.msra.mxu0 0
        %979 = vmatprep.subr.bf16.mxu0 0
        %980 = vmatpush1.bf16.xpose.msra.mxu0 0
        %981 = vmatprep.subr.bf16.mxu0 0
        %982 = vmatpush1.bf16.xpose.msra.mxu0 0
        %983 = vmatprep.mubr.bf16.mxu0 0
        %984 = vmatmul.mubr.bf16.gmra.mrb[0].mxu0 %v943
        %v985 = vpop.f32.mrb[0].mxu0
        %v986 = vadd.f32 0.0, %v985
        %v987 = vpop.f32.mrb[0].mxu0
        %v988 = vpop.f32.mrb[0].mxu0
        %v989 = vadd.f32 0.0, %v988
        %v990 = vpop.f32.mrb[0].mxu0
        %991 = vdwg.mxu0
        %v994 = vunpack.c.l.b16 %v930
        %v995 = vunpack.c.l.b16 %v931
        %v996 = vpack.c.b16 %v995, %v994
        %v998 = vsel %vm941, %v996, 0
        %v1001 = vsel %vm941, %v897, 0
        %v1004 = vsel %vm941, %v899, 0
        %1006 = vmatprep.subr.bf16.mxu0 0
        %1007 = vmatpush1.bf16.xpose.msra.mxu0 %v1001
        %1008 = vmatprep.subr.bf16.mxu0 0
        %1009 = vmatpush1.bf16.xpose.msra.mxu0 %v1004
        %1010 = vmatprep.subr.bf16.mxu0 0
        %1011 = vmatpush1.bf16.xpose.msra.mxu0 0
        %1012 = vmatprep.subr.bf16.mxu0 0
        %1013 = vmatpush1.bf16.xpose.msra.mxu0 0
        %1014 = vmatprep.subr.bf16.mxu0 0
        %1015 = vmatpush1.bf16.xpose.msra.mxu0 0
        %1016 = vmatprep.subr.bf16.mxu0 0
        %1017 = vmatpush1.bf16.xpose.msra.mxu0 0
        %1018 = vmatprep.subr.bf16.mxu0 0
        %1019 = vmatpush1.bf16.xpose.msra.mxu0 0
        %1020 = vmatprep.subr.bf16.mxu0 0
        %1021 = vmatpush1.bf16.xpose.msra.mxu0 0
        %1022 = vmatprep.subr.bf16.mxu0 0
        %1023 = vmatpush1.bf16.xpose.msra.mxu0 0
        %1024 = vmatprep.subr.bf16.mxu0 0
        %1025 = vmatpush1.bf16.xpose.msra.mxu0 0
        %1026 = vmatprep.subr.bf16.mxu0 0
        %1027 = vmatpush1.bf16.xpose.msra.mxu0 0
        %1028 = vmatprep.subr.bf16.mxu0 0
        %1029 = vmatpush1.bf16.xpose.msra.mxu0 0
        %1030 = vmatprep.subr.bf16.mxu0 0
        %1031 = vmatpush1.bf16.xpose.msra.mxu0 0
        %1032 = vmatprep.subr.bf16.mxu0 0
        %1033 = vmatpush1.bf16.xpose.msra.mxu0 0
        %1034 = vmatprep.subr.bf16.mxu0 0
        %1035 = vmatpush1.bf16.xpose.msra.mxu0 0
        %1036 = vmatprep.subr.bf16.mxu0 0
        %1037 = vmatpush1.bf16.xpose.msra.mxu0 0
        %1038 = vmatprep.mubr.bf16.mxu0 0
        %1039 = vmatmul.mubr.bf16.gmra.mrb[0].mxu0 %v998
        %v1040 = vpop.f32.mrb[0].mxu0
        %v1041 = vadd.f32 0.0, %v1040
        %v1042 = vpop.f32.mrb[0].mxu0
        %v1043 = vpop.f32.mrb[0].mxu0
        %v1044 = vadd.f32 0.0, %v1043
        %v1045 = vpop.f32.mrb[0].mxu0
        %1046 = vdwg.mxu0
        %v1049 = vunpack.c.l.b16 %v932
        %v1050 = vunpack.c.l.b16 %v933
        %v1051 = vpack.c.b16 %v1050, %v1049
        %v1053 = vsel %vm941, %v1051, 0
        %v1056 = vsel %vm941, %v901, 0
        %v1059 = vsel %vm941, %v903, 0
        %1061 = vmatprep.subr.bf16.mxu0 0
        %1062 = vmatpush1.bf16.xpose.msra.mxu0 %v1056
        %1063 = vmatprep.subr.bf16.mxu0 0
        %1064 = vmatpush1.bf16.xpose.msra.mxu0 %v1059
        %1065 = vmatprep.subr.bf16.mxu0 0
        %1066 = vmatpush1.bf16.xpose.msra.mxu0 0
        %1067 = vmatprep.subr.bf16.mxu0 0
        %1068 = vmatpush1.bf16.xpose.msra.mxu0 0
        %1069 = vmatprep.subr.bf16.mxu0 0
        %1070 = vmatpush1.bf16.xpose.msra.mxu0 0
        %1071 = vmatprep.subr.bf16.mxu0 0
        %1072 = vmatpush1.bf16.xpose.msra.mxu0 0
        %1073 = vmatprep.subr.bf16.mxu0 0
        %1074 = vmatpush1.bf16.xpose.msra.mxu0 0
        %1075 = vmatprep.subr.bf16.mxu0 0
        %1076 = vmatpush1.bf16.xpose.msra.mxu0 0
        %1077 = vmatprep.subr.bf16.mxu0 0
        %1078 = vmatpush1.bf16.xpose.msra.mxu0 0
        %1079 = vmatprep.subr.bf16.mxu0 0
        %1080 = vmatpush1.bf16.xpose.msra.mxu0 0
        %1081 = vmatprep.subr.bf16.mxu0 0
        %1082 = vmatpush1.bf16.xpose.msra.mxu0 0
        %1083 = vmatprep.subr.bf16.mxu0 0
        %1084 = vmatpush1.bf16.xpose.msra.mxu0 0
        %1085 = vmatprep.subr.bf16.mxu0 0
        %1086 = vmatpush1.bf16.xpose.msra.mxu0 0
        %1087 = vmatprep.subr.bf16.mxu0 0
        %1088 = vmatpush1.bf16.xpose.msra.mxu0 0
        %1089 = vmatprep.subr.bf16.mxu0 0
        %1090 = vmatpush1.bf16.xpose.msra.mxu0 0
        %1091 = vmatprep.subr.bf16.mxu0 0
        %1092 = vmatpush1.bf16.xpose.msra.mxu0 0
        %1093 = vmatprep.mubr.bf16.mxu0 0
        %1094 = vmatmul.mubr.bf16.gmra.mrb[0].mxu0 %v1053
        %v1095 = vpop.f32.mrb[0].mxu0
        %v1096 = vadd.f32 0.0, %v1095
        %v1097 = vpop.f32.mrb[0].mxu0
        %v1098 = vpop.f32.mrb[0].mxu0
        %v1099 = vadd.f32 0.0, %v1098
        %v1100 = vpop.f32.mrb[0].mxu0
        %1101 = vdwg.mxu0
        %v1104 = vunpack.c.l.b16 %v934
        %v1105 = vunpack.c.l.b16 %v935
        %v1106 = vpack.c.b16 %v1105, %v1104
        %v1108 = vsel %vm941, %v1106, 0
        %v1111 = vsel %vm941, %v905, 0
        %v1114 = vsel %vm941, %v907, 0
        %1116 = vmatprep.subr.bf16.mxu0 0
        %1117 = vmatpush1.bf16.xpose.msra.mxu0 %v1111
        %1118 = vmatprep.subr.bf16.mxu0 0
        %1119 = vmatpush1.bf16.xpose.msra.mxu0 %v1114
        %1120 = vmatprep.subr.bf16.mxu0 0
        %1121 = vmatpush1.bf16.xpose.msra.mxu0 0
        %1122 = vmatprep.subr.bf16.mxu0 0
        %1123 = vmatpush1.bf16.xpose.msra.mxu0 0
        %1124 = vmatprep.subr.bf16.mxu0 0
        %1125 = vmatpush1.bf16.xpose.msra.mxu0 0
        %1126 = vmatprep.subr.bf16.mxu0 0
        %1127 = vmatpush1.bf16.xpose.msra.mxu0 0
        %1128 = vmatprep.subr.bf16.mxu0 0
        %1129 = vmatpush1.bf16.xpose.msra.mxu0 0
        %1130 = vmatprep.subr.bf16.mxu0 0
        %1131 = vmatpush1.bf16.xpose.msra.mxu0 0
        %1132 = vmatprep.subr.bf16.mxu0 0
        %1133 = vmatpush1.bf16.xpose.msra.mxu0 0
        %1134 = vmatprep.subr.bf16.mxu0 0
        %1135 = vmatpush1.bf16.xpose.msra.mxu0 0
        %1136 = vmatprep.subr.bf16.mxu0 0
        %1137 = vmatpush1.bf16.xpose.msra.mxu0 0
        %1138 = vmatprep.subr.bf16.mxu0 0
        %1139 = vmatpush1.bf16.xpose.msra.mxu0 0
        %1140 = vmatprep.subr.bf16.mxu0 0
        %1141 = vmatpush1.bf16.xpose.msra.mxu0 0
        %1142 = vmatprep.subr.bf16.mxu0 0
        %1143 = vmatpush1.bf16.xpose.msra.mxu0 0
        %1144 = vmatprep.subr.bf16.mxu0 0
        %1145 = vmatpush1.bf16.xpose.msra.mxu0 0
        %1146 = vmatprep.subr.bf16.mxu0 0
        %1147 = vmatpush1.bf16.xpose.msra.mxu0 0
        %1148 = vmatprep.mubr.bf16.mxu0 0
        %1149 = vmatmul.mubr.bf16.gmra.mrb[0].mxu0 %v1108
        %v1150 = vpop.f32.mrb[0].mxu0
        %v1151 = vadd.f32 0.0, %v1150
        %v1152 = vpop.f32.mrb[0].mxu0
        %v1153 = vpop.f32.mrb[0].mxu0
        %v1154 = vadd.f32 0.0, %v1153
        %v1155 = vpop.f32.mrb[0].mxu0
        %1156 = vdwg.mxu0
        %v1157 = vsel %vm941, %v986, -inf
        %1158 = vmax.xlane.f32.xlu0 %v1157
        %v1159 = vpop.xlane.xlu0 %1158
        %v1160 = vsel %vm941, %v989, -inf
        %1161 = vmax.xlane.f32.xlu0 %v1160
        %v1162 = vpop.xlane.xlu0 %1161
        %v1163 = vsel %vm941, %v1041, -inf
        %1164 = vmax.xlane.f32.xlu0 %v1163
        %v1165 = vpop.xlane.xlu0 %1164
        %v1166 = vsel %vm941, %v1044, -inf
        %1167 = vmax.xlane.f32.xlu0 %v1166
        %v1168 = vpop.xlane.xlu0 %1167
        %v1169 = vsel %vm941, %v1096, -inf
        %1170 = vmax.xlane.f32.xlu0 %v1169
        %v1171 = vpop.xlane.xlu0 %1170
        %v1172 = vsel %vm941, %v1099, -inf
        %1173 = vmax.xlane.f32.xlu0 %v1172
        %v1174 = vpop.xlane.xlu0 %1173
        %v1175 = vsel %vm941, %v1151, -inf
        %1176 = vmax.xlane.f32.xlu0 %v1175
        %v1177 = vpop.xlane.xlu0 %1176
        %v1178 = vsel %vm941, %v1154, -inf
        %1179 = vmax.xlane.f32.xlu0 %v1178
        %v1180 = vpop.xlane.xlu0 %1179
        %v1181 = vsub.f32 %v986, %v1159
        %v1182 = vsub.f32 %v989, %v1162
        %v1183 = vsub.f32 %v1041, %v1165
        %v1184 = vsub.f32 %v1044, %v1168
        %v1185 = vsub.f32 %v1096, %v1171
        %v1186 = vsub.f32 %v1099, %v1174
        %v1187 = vsub.f32 %v1151, %v1177
        %v1188 = vsub.f32 %v1154, %v1180
        %v1189 = vmul.f32 %v1181, 1.442695
        %v1190 = vpow.pop %v1189
        %v1191 = vmul.f32 %v1182, 1.442695
        %v1192 = vpow.pop %v1191
        %v1193 = vmul.f32 %v1183, 1.442695
        %v1194 = vpow.pop %v1193
        %v1195 = vmul.f32 %v1184, 1.442695
        %v1196 = vpow.pop %v1195
        %v1197 = vmul.f32 %v1185, 1.442695
        %v1198 = vpow.pop %v1197
        %v1199 = vmul.f32 %v1186, 1.442695
        %v1200 = vpow.pop %v1199
        %v1201 = vmul.f32 %v1187, 1.442695
        %v1202 = vpow.pop %v1201
        %v1203 = vmul.f32 %v1188, 1.442695
        %v1204 = vpow.pop %v1203
        %v1205 = vsel %vm941, %v1190, 0.0
        %1206 = vadd.xlane.f32.xlu0 %v1205
        %v1207 = vpop.xlane.xlu0 %1206
        %v1208 = vsel %vm941, %v1192, 0.0
        %1209 = vadd.xlane.f32.xlu0 %v1208
        %v1210 = vpop.xlane.xlu0 %1209
        %v1211 = vsel %vm941, %v1194, 0.0
        %1212 = vadd.xlane.f32.xlu0 %v1211
        %v1213 = vpop.xlane.xlu0 %1212
        %v1214 = vsel %vm941, %v1196, 0.0
        %1215 = vadd.xlane.f32.xlu0 %v1214
        %v1216 = vpop.xlane.xlu0 %1215
        %v1217 = vsel %vm941, %v1198, 0.0
        %1218 = vadd.xlane.f32.xlu0 %v1217
        %v1219 = vpop.xlane.xlu0 %1218
        %v1220 = vsel %vm941, %v1200, 0.0
        %1221 = vadd.xlane.f32.xlu0 %v1220
        %v1222 = vpop.xlane.xlu0 %1221
        %v1223 = vsel %vm941, %v1202, 0.0
        %1224 = vadd.xlane.f32.xlu0 %v1223
        %v1225 = vpop.xlane.xlu0 %1224
        %v1226 = vsel %vm941, %v1204, 0.0
        %1227 = vadd.xlane.f32.xlu0 %v1226
        %v1228 = vpop.xlane.xlu0 %1227
        %v1229 = vrcp.pop %v1207
        %v1230 = vrcp.pop %v1210
        %v1231 = vrcp.pop %v1213
        %v1232 = vrcp.pop %v1216
        %v1233 = vrcp.pop %v1219
        %v1234 = vrcp.pop %v1222
        %v1235 = vrcp.pop %v1225
        %v1236 = vrcp.pop %v1228
        %v1237 = vmul.f32 %v1190, %v1229
        %v1238 = vmul.f32 %v1192, %v1230
        %v1239 = vmul.f32 %v1194, %v1231
        %v1240 = vmul.f32 %v1196, %v1232
        %v1241 = vmul.f32 %v1198, %v1233
        %v1242 = vmul.f32 %v1200, %v1234
        %v1243 = vmul.f32 %v1202, %v1235
        %v1244 = vmul.f32 %v1204, %v1236
        %v1245 = vpack.c.bf16 %v1238, %v1237
        %v1246 = vpack.c.bf16 %v1240, %v1239
        %v1247 = vpack.c.bf16 %v1242, %v1241
        %v1248 = vpack.c.bf16 %v1244, %v1243
        %v1250 = vsel %vm941, %v1245, 0
        %1252 = vmatprep.subr.bf16.mxu0 0
        %1253 = vmatpush1.bf16.msra.mxu0 %v892
        %1254 = vmatprep.subr.bf16.mxu0 0
        %1255 = vmatpush1.bf16.msra.mxu0 %v893
        %1256 = vmatprep.subr.bf16.mxu0 0
        %1257 = vmatpush1.bf16.msra.mxu0 0
        %1258 = vmatprep.subr.bf16.mxu0 0
        %1259 = vmatpush1.bf16.msra.mxu0 0
        %1260 = vmatprep.subr.bf16.mxu0 0
        %1261 = vmatpush1.bf16.msra.mxu0 0
        %1262 = vmatprep.subr.bf16.mxu0 0
        %1263 = vmatpush1.bf16.msra.mxu0 0
        %1264 = vmatprep.subr.bf16.mxu0 0
        %1265 = vmatpush1.bf16.msra.mxu0 0
        %1266 = vmatprep.subr.bf16.mxu0 0
        %1267 = vmatpush1.bf16.msra.mxu0 0
        %1268 = vmatprep.subr.bf16.mxu0 0
        %1269 = vmatpush1.bf16.msra.mxu0 0
        %1270 = vmatprep.subr.bf16.mxu0 0
        %1271 = vmatpush1.bf16.msra.mxu0 0
        %1272 = vmatprep.subr.bf16.mxu0 0
        %1273 = vmatpush1.bf16.msra.mxu0 0
        %1274 = vmatprep.subr.bf16.mxu0 0
        %1275 = vmatpush1.bf16.msra.mxu0 0
        %1276 = vmatprep.subr.bf16.mxu0 0
        %1277 = vmatpush1.bf16.msra.mxu0 0
        %1278 = vmatprep.subr.bf16.mxu0 0
        %1279 = vmatpush1.bf16.msra.mxu0 0
        %1280 = vmatprep.subr.bf16.mxu0 0
        %1281 = vmatpush1.bf16.msra.mxu0 0
        %1282 = vmatprep.subr.bf16.mxu0 0
        %1283 = vmatpush1.bf16.msra.mxu0 0
        %1284 = vmatprep.mubr.bf16.mxu0 0
        %1285 = vmatmul.mubr.bf16.gmra.mrb[0].mxu0 %v1250
        %v1286 = vpop.f32.mrb[0].mxu0
        %v1287 = vadd.f32 0.0, %v1286
        %v1288 = vpop.f32.mrb[0].mxu0
        %v1289 = vpop.f32.mrb[0].mxu0
        %v1290 = vadd.f32 0.0, %v1289
        %v1291 = vpop.f32.mrb[0].mxu0
        %1292 = vdwg.mxu0
        %v1294 = vsel %vm941, %v1246, 0
        %1296 = vmatprep.subr.bf16.mxu0 0
        %1297 = vmatpush1.bf16.msra.mxu0 %v911
        %1298 = vmatprep.subr.bf16.mxu0 0
        %1299 = vmatpush1.bf16.msra.mxu0 %v913
        %1300 = vmatprep.subr.bf16.mxu0 0
        %1301 = vmatpush1.bf16.msra.mxu0 0
        %1302 = vmatprep.subr.bf16.mxu0 0
        %1303 = vmatpush1.bf16.msra.mxu0 0
        %1304 = vmatprep.subr.bf16.mxu0 0
        %1305 = vmatpush1.bf16.msra.mxu0 0
        %1306 = vmatprep.subr.bf16.mxu0 0
        %1307 = vmatpush1.bf16.msra.mxu0 0
        %1308 = vmatprep.subr.bf16.mxu0 0
        %1309 = vmatpush1.bf16.msra.mxu0 0
        %1310 = vmatprep.subr.bf16.mxu0 0
        %1311 = vmatpush1.bf16.msra.mxu0 0
        %1312 = vmatprep.subr.bf16.mxu0 0
        %1313 = vmatpush1.bf16.msra.mxu0 0
        %1314 = vmatprep.subr.bf16.mxu0 0
        %1315 = vmatpush1.bf16.msra.mxu0 0
        %1316 = vmatprep.subr.bf16.mxu0 0
        %1317 = vmatpush1.bf16.msra.mxu0 0
        %1318 = vmatprep.subr.bf16.mxu0 0
        %1319 = vmatpush1.bf16.msra.mxu0 0
        %1320 = vmatprep.subr.bf16.mxu0 0
        %1321 = vmatpush1.bf16.msra.mxu0 0
        %1322 = vmatprep.subr.bf16.mxu0 0
        %1323 = vmatpush1.bf16.msra.mxu0 0
        %1324 = vmatprep.subr.bf16.mxu0 0
        %1325 = vmatpush1.bf16.msra.mxu0 0
        %1326 = vmatprep.subr.bf16.mxu0 0
        %1327 = vmatpush1.bf16.msra.mxu0 0
        %1328 = vmatprep.mubr.bf16.mxu0 0
        %1329 = vmatmul.mubr.bf16.gmra.mrb[0].mxu0 %v1294
        %v1330 = vpop.f32.mrb[0].mxu0
        %v1331 = vadd.f32 0.0, %v1330
        %v1332 = vpop.f32.mrb[0].mxu0
        %v1333 = vpop.f32.mrb[0].mxu0
        %v1334 = vadd.f32 0.0, %v1333
        %v1335 = vpop.f32.mrb[0].mxu0
        %1336 = vdwg.mxu0
        %v1338 = vsel %vm941, %v1247, 0
        %1340 = vmatprep.subr.bf16.mxu0 0
        %1341 = vmatpush1.bf16.msra.mxu0 %v917
        %1342 = vmatprep.subr.bf16.mxu0 0
        %1343 = vmatpush1.bf16.msra.mxu0 %v919
        %1344 = vmatprep.subr.bf16.mxu0 0
        %1345 = vmatpush1.bf16.msra.mxu0 0
        %1346 = vmatprep.subr.bf16.mxu0 0
        %1347 = vmatpush1.bf16.msra.mxu0 0
        %1348 = vmatprep.subr.bf16.mxu0 0
        %1349 = vmatpush1.bf16.msra.mxu0 0
        %1350 = vmatprep.subr.bf16.mxu0 0
        %1351 = vmatpush1.bf16.msra.mxu0 0
        %1352 = vmatprep.subr.bf16.mxu0 0
        %1353 = vmatpush1.bf16.msra.mxu0 0
        %1354 = vmatprep.subr.bf16.mxu0 0
        %1355 = vmatpush1.bf16.msra.mxu0 0
        %1356 = vmatprep.subr.bf16.mxu0 0
        %1357 = vmatpush1.bf16.msra.mxu0 0
        %1358 = vmatprep.subr.bf16.mxu0 0
        %1359 = vmatpush1.bf16.msra.mxu0 0
        %1360 = vmatprep.subr.bf16.mxu0 0
        %1361 = vmatpush1.bf16.msra.mxu0 0
        %1362 = vmatprep.subr.bf16.mxu0 0
        %1363 = vmatpush1.bf16.msra.mxu0 0
        %1364 = vmatprep.subr.bf16.mxu0 0
        %1365 = vmatpush1.bf16.msra.mxu0 0
        %1366 = vmatprep.subr.bf16.mxu0 0
        %1367 = vmatpush1.bf16.msra.mxu0 0
        %1368 = vmatprep.subr.bf16.mxu0 0
        %1369 = vmatpush1.bf16.msra.mxu0 0
        %1370 = vmatprep.subr.bf16.mxu0 0
        %1371 = vmatpush1.bf16.msra.mxu0 0
        %1372 = vmatprep.mubr.bf16.mxu0 0
        %1373 = vmatmul.mubr.bf16.gmra.mrb[0].mxu0 %v1338
        %v1374 = vpop.f32.mrb[0].mxu0
        %v1375 = vadd.f32 0.0, %v1374
        %v1376 = vpop.f32.mrb[0].mxu0
        %v1377 = vpop.f32.mrb[0].mxu0
        %v1378 = vadd.f32 0.0, %v1377
        %v1379 = vpop.f32.mrb[0].mxu0
        %1380 = vdwg.mxu0
        %v1382 = vsel %vm941, %v1248, 0
        %1384 = vmatprep.subr.bf16.mxu0 0
        %1385 = vmatpush1.bf16.msra.mxu0 %v923
        %1386 = vmatprep.subr.bf16.mxu0 0
        %1387 = vmatpush1.bf16.msra.mxu0 %v925
        %1388 = vmatprep.subr.bf16.mxu0 0
        %1389 = vmatpush1.bf16.msra.mxu0 0
        %1390 = vmatprep.subr.bf16.mxu0 0
        %1391 = vmatpush1.bf16.msra.mxu0 0
        %1392 = vmatprep.subr.bf16.mxu0 0
        %1393 = vmatpush1.bf16.msra.mxu0 0
        %1394 = vmatprep.subr.bf16.mxu0 0
        %1395 = vmatpush1.bf16.msra.mxu0 0
        %1396 = vmatprep.subr.bf16.mxu0 0
        %1397 = vmatpush1.bf16.msra.mxu0 0
        %1398 = vmatprep.subr.bf16.mxu0 0
        %1399 = vmatpush1.bf16.msra.mxu0 0
        %1400 = vmatprep.subr.bf16.mxu0 0
        %1401 = vmatpush1.bf16.msra.mxu0 0
        %1402 = vmatprep.subr.bf16.mxu0 0
        %1403 = vmatpush1.bf16.msra.mxu0 0
        %1404 = vmatprep.subr.bf16.mxu0 0
        %1405 = vmatpush1.bf16.msra.mxu0 0
        %1406 = vmatprep.subr.bf16.mxu0 0
        %1407 = vmatpush1.bf16.msra.mxu0 0
        %1408 = vmatprep.subr.bf16.mxu0 0
        %1409 = vmatpush1.bf16.msra.mxu0 0
        %1410 = vmatprep.subr.bf16.mxu0 0
        %1411 = vmatpush1.bf16.msra.mxu0 0
        %1412 = vmatprep.subr.bf16.mxu0 0
        %1413 = vmatpush1.bf16.msra.mxu0 0
        %1414 = vmatprep.subr.bf16.mxu0 0
        %1415 = vmatpush1.bf16.msra.mxu0 0
        %1416 = vmatprep.mubr.bf16.mxu0 0
        %1417 = vmatmul.mubr.bf16.gmra.mrb[0].mxu0 %v1382
        %v1418 = vpop.f32.mrb[0].mxu0
        %v1419 = vadd.f32 0.0, %v1418
        %v1420 = vpop.f32.mrb[0].mxu0
        %v1421 = vpop.f32.mrb[0].mxu0
        %v1422 = vadd.f32 0.0, %v1421
        %v1423 = vpop.f32.mrb[0].mxu0
        %1424 = vdwg.mxu0
        %v1425 = vpack.c.bf16 %v1290, %v1287
        %v1426 = vpack.c.bf16 %v1334, %v1331
        %v1427 = vpack.c.bf16 %v1378, %v1375
        %v1428 = vpack.c.bf16 %v1422, %v1419
        %1430 = vrot.lane.b32.xlu0 %v1426, 32
        %v1431 = vpop.permute.xlu0 %1430
        %1433 = vrot.lane.b32.xlu0 %v1427, 64
        %v1434 = vpop.permute.xlu0 %1433
        %1436 = vrot.lane.b32.xlu0 %v1428, 96
        %v1437 = vpop.permute.xlu0 %1436
        %v1440 = vsel %vm941, %v1425, %v1431
        %v1442 = vsel %vm517, %v1440, %v1434
        %vm1443 = vcmask 785408
        %v1445 = vsel %vm1443, %v1442, %v1437
        %v1447 = vld [vmem:[#allocation11] sm:$0xf]
        %v1448 = vld [vmem:[#allocation11 + $0x4] sm:$0xf]
        %v1449 = vld [vmem:[#allocation11 + $0x8] sm:$0xf]
        %v1450 = vld [vmem:[#allocation11 + $0xc] sm:$0xf]
        %v1451 = vld [vmem:[#allocation11 + $0x10] sm:$0xf]
        %v1452 = vld [vmem:[#allocation11 + $0x14] sm:$0xf]
        %v1453 = vld [vmem:[#allocation11 + $0x18] sm:$0xf]
        %v1454 = vld [vmem:[#allocation11 + $0x1c] sm:$0xf]
        %v1455 = vld [vmem:[#allocation11 + $0x20] sm:$0xf]
        %v1456 = vld [vmem:[#allocation11 + $0x24] sm:$0xf]
        %v1457 = vld [vmem:[#allocation11 + $0x28] sm:$0xf]
        %v1458 = vld [vmem:[#allocation11 + $0x2c] sm:$0xf]
        %v1459 = vld [vmem:[#allocation11 + $0x30] sm:$0xf]
        %v1460 = vld [vmem:[#allocation11 + $0x34] sm:$0xf]
        %v1461 = vld [vmem:[#allocation11 + $0x38] sm:$0xf]
        %v1462 = vld [vmem:[#allocation11 + $0x3c] sm:$0xf]
        %v1463 = vld [vmem:[%s10] sm:$0x1]
        %v1465 = vlaneseq
        %v1466 = vshrl.u32 %v1465, 7
        %v1467 = vsub.s32 0, %v1466
        %v1468 = vrot.slane %v1463, %v1467
        %v1486 = vunpack.c.l.b16 %v1447
        %v1487 = vunpack.c.l.b16 %v1448
        %v1488 = vunpack.c.l.b16 %v1449
        %v1489 = vunpack.c.l.b16 %v1450
        %v1490 = vunpack.c.l.b16 %v1451
        %v1491 = vunpack.c.l.b16 %v1452
        %v1492 = vunpack.c.l.b16 %v1453
        %v1493 = vunpack.c.l.b16 %v1454
        %v1494 = vunpack.c.l.b16 %v1455
        %v1495 = vunpack.c.l.b16 %v1456
        %v1496 = vunpack.c.l.b16 %v1457
        %v1497 = vunpack.c.l.b16 %v1458
        %v1498 = vunpack.c.l.b16 %v1459
        %v1499 = vunpack.c.l.b16 %v1460
        %v1500 = vunpack.c.l.b16 %v1461
        %v1501 = vunpack.c.l.b16 %v1462
        %v1502 = vpack.c.b16 %v1487, %v1486
        %v1503 = vpack.c.b16 %v1489, %v1488
        %v1504 = vpack.c.b16 %v1491, %v1490
        %v1505 = vpack.c.b16 %v1493, %v1492
        %v1506 = vpack.c.b16 %v1495, %v1494
        %v1507 = vpack.c.b16 %v1497, %v1496
        %v1508 = vpack.c.b16 %v1499, %v1498
        %v1509 = vpack.c.b16 %v1501, %v1500
        %1518 = vmatprep.subr.bf16.mxu0 0
        %1519 = vmatpush1.bf16.msra.mxu0 %v1502
        %1520 = vmatprep.subr.bf16.mxu0 0
        %1521 = vmatpush1.bf16.msra.mxu0 %v1503
        %1522 = vmatprep.subr.bf16.mxu0 0
        %1523 = vmatpush1.bf16.msra.mxu0 %v1504
        %1524 = vmatprep.subr.bf16.mxu0 0
        %1525 = vmatpush1.bf16.msra.mxu0 %v1505
        %1526 = vmatprep.subr.bf16.mxu0 0
        %1527 = vmatpush1.bf16.msra.mxu0 %v1506
        %1528 = vmatprep.subr.bf16.mxu0 0
        %1529 = vmatpush1.bf16.msra.mxu0 %v1507
        %1530 = vmatprep.subr.bf16.mxu0 0
        %1531 = vmatpush1.bf16.msra.mxu0 %v1508
        %1532 = vmatprep.subr.bf16.mxu0 0
        %1533 = vmatpush1.bf16.msra.mxu0 %v1509
        %1534 = vmatprep.subr.bf16.mxu0 0
        %1535 = vmatpush1.bf16.msra.mxu0 0
        %1536 = vmatprep.subr.bf16.mxu0 0
        %1537 = vmatpush1.bf16.msra.mxu0 0
        %1538 = vmatprep.subr.bf16.mxu0 0
        %1539 = vmatpush1.bf16.msra.mxu0 0
        %1540 = vmatprep.subr.bf16.mxu0 0
        %1541 = vmatpush1.bf16.msra.mxu0 0
        %1542 = vmatprep.subr.bf16.mxu0 0
        %1543 = vmatpush1.bf16.msra.mxu0 0
        %1544 = vmatprep.subr.bf16.mxu0 0
        %1545 = vmatpush1.bf16.msra.mxu0 0
        %1546 = vmatprep.subr.bf16.mxu0 0
        %1547 = vmatpush1.bf16.msra.mxu0 0
        %1548 = vmatprep.subr.bf16.mxu0 0
        %1549 = vmatpush1.bf16.msra.mxu0 0
        %1550 = vmatprep.mubr.bf16.mxu0 0
        %1551 = vmatmul.mubr.bf16.gmra.mrb[0].mxu0 %v1445
        %v1552 = vpop.f32.mrb[0].mxu0
        %v1553 = vadd.f32 %v1468, %v1552
        %v1554 = vpop.f32.mrb[0].mxu0
        %v1555 = vpop.f32.mrb[0].mxu0
        %v1556 = vadd.f32 %v1468, %v1555
        %v1557 = vpop.f32.mrb[0].mxu0
        %1558 = vdwg.mxu0
        %1559 = vst [vmem:[%s477] sm:$0xff] %v1553
        %1560 = vst [vmem:[%s477 + $0x8] sm:$0xff] %v1556
        %s1561 = sand.u32 %s275, 1
        %s1562 = scalar_lea.sflag [#allocation4], %s1561
        %s1563 = sand.u32 %s275, 1
        %s1564 = smul.addr %s1563, 16
        %s1565 = scalar_lea.vmem [#allocation13], %s1564
        // Predicated region
        $region89: #{tpu_custom_call.1} parent=63 // pred_check
          %p1566 = pneg %p285
        $region90: #{tpu_custom_call.1} parent=63 // pred_check_branch
          %1568 = sbr.rel (%p1566) target = $region92
        $region91: #{tpu_custom_call.1} parent=63 // pred_region
          %s1570 = ssub.s32 256, 256
          %1571 = vsyncadd %s1562, %s1570
          %s1572 = smul.addr %s31, 2
          %s1573 = smul.addr %s1572, 128
          %s1574 = scalar_lea.hbm %s11, %s1573
          %s1575 = sshll.u32 %s1565, 4
          %s1576 = int_to_ptr.vmem [resolvable:$true] %s1575
          %1581 = dma.vmem_to_hbm [thread:$0]  %s1576, 256, %s1574, %s1562, 128, 128, 8
        $region92: #{tpu_custom_call.1} parent=63 // pred_fallthru
          _
      $region64: #{tpu_custom_call.1} parent=5 // pred_fallthru
        _
      %p1582 = scmp.le.s32.totalorder 2, %s26
      // Predicated region
      $region93: #{tpu_custom_call.1} parent=5 // pred_check
        %p1583 = pneg %p1582
      $region94: #{tpu_custom_call.1} parent=5 // pred_check_branch
        %1585 = sbr.rel (%p1583) target = $region96
      $region95: #{tpu_custom_call.1} parent=5 // pred_region
        %s1586 = ssub.s32 %s26, 2
        // Predicated region
        $region97: #{tpu_custom_call.1} parent=95 // pred_check
          %p1587 = pneg %p291
        $region98: #{tpu_custom_call.1} parent=95 // pred_check_branch
          %1589 = sbr.rel (%p1587) target = $region100
        $region99: #{tpu_custom_call.1} parent=95 // pred_region
          %s1590 = sand.u32 %s276, 1
          %s1591 = scalar_lea.sflag [#allocation4], %s1590
          %s1592 = sand.u32 %s276, 1
          %s1593 = smul.addr %s1592, 16
          %s1594 = scalar_lea.vmem [#allocation13], %s1593
          %1595 = dma.done %s1591, 256
        $region100: #{tpu_custom_call.1} parent=95 // pred_fallthru
          _
      $region96: #{tpu_custom_call.1} parent=5 // pred_fallthru
        _
    $region6: #{tpu_custom_call.1} parent=1 // loop_footer
      %s30 = sadd.s32 1, %s26
    $region7: #{tpu_custom_call.1} parent=1 // loop_footer_branch
      %25 = sbr.rel target = $region3
    $region8: #{tpu_custom_call.1} parent=1 // loop_exit
      _
    %1596 = vsyncpa [#allocation3], 1
    %s1597 = scalar_lea.sflag [#allocation3], 1
    %1598 = vsyncpa %s1597, 1
    %1599 = vsyncpa [#allocation6], 1
    %1600 = vsyncpa [#allocation9], 1
    %1601 = vsyncpa [#allocation12], 1
    %1602 = vsyncpa [#allocation4], 1
    %s1603 = scalar_lea.sflag [#allocation4], 1
    %1604 = vsyncpa %s1603, 1

</llo_original>
